<compile_context>
chip_gen: v5e
topology: v5e:2x2
jax: 0.10.0
libtpu: 0.0.40
codegen_flags: <defaults>
</compile_context>

<pallas_src>
import jax
import jax.numpy as jnp
from jax import lax
from jax.experimental import pallas as pl
from jax.experimental.pallas import tpu as pltpu


def _mincut_kernel(adj_ref, xT_ref, w1T_ref, b1T_ref, w2T_ref, b2T_ref,
                   wmT_ref, bmT_ref,
                   s_out_ref, loss_ref,
                   lhs_ref, h1_ref, d_ref, acc_ref, num_ref):
    f32, bf16 = jnp.float32, jnp.bfloat16
    p = pl.program_id(0)          # phase: 0 = GCN layer 1, 1 = GCN layer 2 (+head), 2 = trace(s^T A s)
    j = pl.program_id(1)          # output-node tile
    k = pl.program_id(2)          # contraction-node tile (reduction axis, last)
    nj = pl.num_programs(1)
    nk = pl.num_programs(2)

    R, T = acc_ref.shape
    H1 = w1T_ref.shape[0]
    H2 = w2T_ref.shape[0]
    K = wmT_ref.shape[0]

    jT = pl.multiple_of(j * T, T)
    kT = pl.multiple_of(k * T, T)

    # Current adjacency block (bf16; 0/1 entries are exact).  In resident mode
    # adj_ref is the full [N, N] array kept in VMEM; slice the (k, j) tile here.
    if adj_ref.shape == (T, T):
        adj_blk = adj_ref[...]
    else:
        adj_blk = adj_ref[pl.ds(kT, T), pl.ds(jT, T)]

    # ------------- per-phase setup (once, at j == 0 and k == 0) -------------
    @pl.when((j == 0) & (k == 0))
    def _setup():
        @pl.when(p == 0)
        def _():   # phase-0 LHS: (x @ W1)^T = W1^T x^T, [H1, N]
            l1 = jnp.dot(w1T_ref[...], xT_ref[...], preferred_element_type=f32)
            lhs_ref[0:H1, :] = l1.astype(bf16)

        @pl.when(p == 1)
        def _():   # phase-1 LHS: (h1 @ W2)^T = W2^T h1^T, [H2, N]
            l2 = jnp.dot(w2T_ref[...], h1_ref[...], preferred_element_type=f32)
            lhs_ref[0:H2, :] = l2.astype(bf16)

        @pl.when(p == 2)
        def _():   # phase-2 LHS: s^T, [K, N]; reset the trace accumulator
            lhs_ref[0:K, :] = s_out_ref[...].astype(bf16)
            num_ref[...] = jnp.zeros_like(num_ref)

    # ------ phases 0 & 1: GCN sweep  out^T[:, j] += LHS[:, k] @ A[k, j] ------
    # (Rows of lhs_ref beyond the current phase's LHS height are stale/garbage;
    #  the corresponding accumulator rows are simply never read.)
    @pl.when(p < 2)
    def _gcn_accum():
        @pl.when(k == 0)
        def _():
            acc_ref[...] = jnp.zeros_like(acc_ref)
        acc_ref[...] += jnp.dot(lhs_ref[:, pl.ds(kT, T)], adj_blk,
                                preferred_element_type=f32)

    # degrees d = A @ 1, fused into phase 0 as block column sums (adj symmetric)
    @pl.when(p == 0)
    def _degrees():
        @pl.when(k == 0)
        def _():
            d_ref[:, pl.ds(jT, T)] = jnp.zeros((1, T), f32)
        d_ref[:, pl.ds(jT, T)] += jnp.sum(adj_blk.astype(f32), axis=0,
                                          keepdims=True)

    # ------ phase-0 finalize: bias + ReLU -> h1^T tile (bf16, resident) ------
    @pl.when((p == 0) & (k == nk - 1))
    def _fin0():
        h1 = jnp.maximum(acc_ref[0:H1, :] + b1T_ref[...], 0.0)
        h1_ref[:, pl.ds(jT, T)] = h1.astype(bf16)

    # -- phase-1 finalize: bias + ReLU + MLP head + softmax -> s^T tile (f32) --
    @pl.when((p == 1) & (k == nk - 1))
    def _fin1():
        h2 = jnp.maximum(acc_ref[0:H2, :] + b2T_ref[...], 0.0)
        logits = jnp.dot(wmT_ref[...], h2.astype(bf16),
                         preferred_element_type=f32) + bmT_ref[...]      # [K, T]
        m = jnp.max(logits, axis=0, keepdims=True)
        e = jnp.exp(logits - m)
        s = e * pl.reciprocal(jnp.sum(e, axis=0, keepdims=True), approx=True)
        s_out_ref[:, pl.ds(jT, T)] = s

    # ------- phase 2: accumulate trace(s^T A s); finalize both losses --------
    @pl.when(p == 2)
    def _mincut():
        as_blk = jnp.dot(lhs_ref[0:K, pl.ds(kT, T)], adj_blk,
                         preferred_element_type=f32)                     # (A s)^T tile
        num_ref[...] += jnp.sum(s_out_ref[:, pl.ds(jT, T)] * as_blk,
                                keepdims=True)

        @pl.when((j == nj - 1) & (k == nk - 1))
        def _loss():
            sT = s_out_ref[...]                                          # [K, N] f32
            # mincut: -trace(s^T A s) / trace(s^T D s) = -num / sum(d .* colsum(s^2))
            den = jnp.sum(d_ref[...] * jnp.sum(sT * sT, axis=0, keepdims=True))
            mc_loss = -(num_ref[0, 0] / den)          # inf/NaN iff graph has no edges

            # orthogonality: || ss/||ss||_F - I/sqrt(K) ||_F  (tiny K x K Gram)
            ss = lax.dot_general(sT, sT, (((1,), (1,)), ((), ())),
                                 preferred_element_type=f32)             # s^T s, [K, K]
            row = lax.broadcasted_iota(jnp.int32, (K, K), 0)
            col = lax.broadcasted_iota(jnp.int32, (K, K), 1)
            eye = (row == col).astype(f32)
            inv_fro = lax.rsqrt(jnp.sum(ss * ss))
            diff = ss * inv_fro - eye * (1.0 / (K ** 0.5))
            o_loss = jnp.sqrt(jnp.sum(diff * diff))

            loss_ref[0] = mc_loss + o_loss


def mincut_forward(x, adj, params, *, tile=128, adj_resident=None):
    """MinCut forward.  Returns (softmax(s) [N, K] f32, scalar loss).

    Assumes a symmetric (undirected) dense adjacency — the normal MinCut input
    (pass adj.T explicitly for a directed graph).  bf16 adjacency is exact for
    0/1 edges; weighted adjacencies are quantized to bf16.
    """
    w1, b1, w2, b2, wm, bm = params
    N, f_in = x.shape
    H1, H2, K = w1.shape[1], w2.shape[1], wm.shape[1]

    T = tile if (tile > 0 and N % tile == 0) else N      # lane/contraction tile
    nj = N // T
    nk = N // T
    R = max(H1, H2, K)
    R = -(-R // 8) * 8                                   # LHS / accumulator rows, 8-aligned

    if adj_resident is None:
        # Keep the whole adjacency in VMEM (read from HBM once, reused by all
        # three sweeps) when it comfortably fits; stream blocks otherwise.
        adj_resident = (N * N * 2) <= (16 << 20)

    bf16, f32 = jnp.bfloat16, jnp.float32
    # Layout plumbing: everything transposed so in-kernel matmul outputs are
    # lane-dense in the node dimension N; matmul operands pre-cast to bf16 once.
    xT = x.T.astype(bf16)
    w1T, w2T, wmT = w1.T.astype(bf16), w2.T.astype(bf16), wm.T.astype(bf16)
    b1T, b2T, bmT = b1.T.astype(f32), b2.T.astype(f32), bm.T.astype(f32)
    adj_bf = adj.astype(bf16)                            # symmetric -> no transpose

    if adj_resident:
        adj_spec = pl.BlockSpec((N, N), lambda p, j, k: (0, 0))   # DMA'd once, resident
    else:
        # TODO(synk): on v5e consider deeper buffering (pipeline_mode=pl.Buffered(3))
        # on this streamed spec to hide its more exposed HBM latency.
        adj_spec = pl.BlockSpec((T, T), lambda p, j, k: (k, j))

    const2 = lambda p, j, k: (0, 0)
    in_specs = [
        adj_spec,
        pl.BlockSpec((f_in, N), const2),
        pl.BlockSpec((H1, f_in), const2),
        pl.BlockSpec((H1, 1), const2),
        pl.BlockSpec((H2, H1), const2),
        pl.BlockSpec((H2, 1), const2),
        pl.BlockSpec((K, H2), const2),
        pl.BlockSpec((K, 1), const2),
    ]
    out_specs = (
        pl.BlockSpec((K, N), const2),                        # s^T, resident (read back in phase 2)
        pl.BlockSpec(memory_space=pltpu.MemorySpace.SMEM),   # scalar loss
    )
    scratch_shapes = [
        pltpu.VMEM((R, N), bf16),     # per-phase LHS  (W1^T x^T | W2^T h1^T | s^T)
        pltpu.VMEM((H1, N), bf16),    # h1^T
        pltpu.VMEM((1, N), f32),      # node degrees d^T
        pltpu.VMEM((R, T), f32),      # per-output-tile accumulator
        pltpu.VMEM((1, 1), f32),      # running trace(s^T A s)
    ]

    # Explicit VMEM budget: estimated need + ~40% headroom (capped under v7x's 64 MiB/TC).
    adj_vmem = N * N * 2 if adj_resident else 2 * T * T * 2
    need = (adj_vmem + 2 * f_in * N * 2 + K * N * 4
            + R * N * 2 + H1 * N * 2 + 8 * N * 4 + R * T * 4 + (64 << 10))
    vmem_limit = int(min(max(need * 7 // 5, 8 << 20), 48 << 20))

    flops = int(2 * N * (f_in * H1 + H1 * H2 + H2 * K) + 2 * N * N * (H1 + H2 + K))
    bytes_accessed = int((1 if adj_resident else 3) * N * N * 2
                         + f_in * N * 2 + K * N * 4
                         + 2 * (w1.size + b1.size + w2.size + b2.size + wm.size + bm.size)
                         + 4)

    sT, loss = pl.pallas_call(
        _mincut_kernel,
        out_shape=(
            jax.ShapeDtypeStruct((K, N), f32),     # s^T (lane-dense in N)
            jax.ShapeDtypeStruct((1,), f32),       # scalar loss (SMEM)
        ),
        grid_spec=pltpu.PrefetchScalarGridSpec(
            num_scalar_prefetch=0,
            grid=(3, nj, nk),
            in_specs=in_specs,
            out_specs=out_specs,
            scratch_shapes=scratch_shapes),
        compiler_params=pltpu.CompilerParams(
            # TODO(synk): shard the output-node axis across v7x's 2 TensorCores
            # (requires VMEM_SHARED for h1/d/s or per-core LHS recompute); kept
            # sequential here because later phases read scratch written by all tiles.
            dimension_semantics=("arbitrary", "arbitrary", "arbitrary"),
            vmem_limit_bytes=vmem_limit),
        cost_estimate=pl.CostEstimate(flops=flops, transcendentals=int(N * K),
                                      bytes_accessed=bytes_accessed),
    )(adj_bf, xT, w1T, b1T, w2T, b2T, wmT, bmT)
    return sT.T, loss[0]


def _reference(x, adj, params):
    w1, b1, w2, b2, wm, bm = params
    h = jnp.maximum(adj @ (x @ w1) + b1, 0.0)
    h = jnp.maximum(adj @ (h @ w2) + b2, 0.0)
    s_logits = h @ wm + bm
    s = jax.nn.softmax(s_logits, axis=-1)
    K = s.shape[-1]
    mincut_num = jnp.trace(s.T @ adj @ s)
    d = jnp.sum(adj, axis=-1)
    mincut_den = jnp.trace(s.T @ (d[:, None] * s))
    mc_loss = -(mincut_num / mincut_den)
    ss = s.T @ s
    i_s = jnp.eye(K)
    o_loss = jnp.linalg.norm(ss / jnp.linalg.norm(ss) - i_s / jnp.linalg.norm(i_s))
    return s, mc_loss + o_loss


if __name__ == "__main__":
    # Shapes implied by the module: mp_units=[32, 16], mp_act='ReLU', n_clusters=4,
    # mlp_units=[] (single Linear head).  N=256 nodes with tile=128 so the
    # (3, 2, 2) grid actually exercises multi-tile streaming and accumulation.
    N, F_IN, H1, H2, K = 256, 8, 32, 16, 4

    key = jax.random.PRNGKey(0)
    kx, kw1, kb1, kw2, kb2, kwm, kbm = jax.random.split(key, 7)

    x = jax.random.normal(kx, (N, F_IN), dtype=jnp.float32)

    # Deterministic symmetric ring adjacency (undirected, no self loops),
    # equivalent to to_dense_adj of a bidirectional ring edge_index.
    idx = jnp.arange(N)
    adj = jnp.zeros((N, N), jnp.float32)
    adj = adj.at[idx, (idx + 1) % N].set(1.0)
    adj = adj.at[(idx + 1) % N, idx].set(1.0)

    params = (
        0.1 * jax.random.normal(kw1, (F_IN, H1), dtype=jnp.float32),
        0.1 * jax.random.normal(kb1, (1, H1), dtype=jnp.float32),
        0.1 * jax.random.normal(kw2, (H1, H2), dtype=jnp.float32),
        0.1 * jax.random.normal(kb2, (1, H2), dtype=jnp.float32),
        0.1 * jax.random.normal(kwm, (H2, K), dtype=jnp.float32),
        0.1 * jax.random.normal(kbm, (1, K), dtype=jnp.float32),
    )

    # Path 1: adjacency kept VMEM-resident (DMA'd once); path 2: streamed blocks.
    s_res, loss_res = mincut_forward(x, adj, params)
    s_str, loss_str = mincut_forward(x, adj, params, adj_resident=False)
    jax.block_until_ready((s_res, loss_res, s_str, loss_str))

    s_exp, loss_exp = _reference(x, adj, params)
    # bf16 matmul operands with f32 accumulation -> compare at bf16-level tolerance.
    assert jnp.allclose(s_res, s_exp, atol=2e-2, rtol=2e-2)
    assert jnp.allclose(s_str, s_exp, atol=2e-2, rtol=2e-2)
    assert jnp.allclose(loss_res, loss_exp, atol=2e-2, rtol=2e-2)
    assert jnp.allclose(loss_str, loss_exp, atol=2e-2, rtol=2e-2)

    print("KERNEL_OK")
</pallas_src>

<mosaic_0001>
module attributes {stable_mosaic.version = 11 : i64} {
  func.func @_mincut_kernel(%arg0: i32, %arg1: i32, %arg2: i32, %arg3: memref<256x256xbf16, #tpu.memory_space<vmem>>, %arg4: memref<8x256xbf16, #tpu.memory_space<vmem>>, %arg5: memref<32x8xbf16, #tpu.memory_space<vmem>>, %arg6: memref<32x1xf32, #tpu.memory_space<vmem>>, %arg7: memref<16x32xbf16, #tpu.memory_space<vmem>>, %arg8: memref<16x1xf32, #tpu.memory_space<vmem>>, %arg9: memref<4x16xbf16, #tpu.memory_space<vmem>>, %arg10: memref<4x1xf32, #tpu.memory_space<vmem>>, %arg11: memref<4x256xf32, #tpu.memory_space<vmem>>, %arg12: memref<1xf32, #tpu.memory_space<smem>>, %arg13: memref<32x256xbf16, #tpu.memory_space<vmem>>, %arg14: memref<32x256xbf16, #tpu.memory_space<vmem>>, %arg15: memref<1x256xf32, #tpu.memory_space<vmem>>, %arg16: memref<32x128xf32, #tpu.memory_space<vmem>>, %arg17: memref<1x1xf32, #tpu.memory_space<vmem>>) attributes {dimension_semantics = [#tpu.dimension_semantics<arbitrary>, #tpu.dimension_semantics<arbitrary>, #tpu.dimension_semantics<arbitrary>], iteration_bounds = array<i64: 3, 2, 2>, scalar_prefetch = 0 : i64, scratch_operands = 5 : i64, tpu.core_type = #tpu.core_type<tc>, window_params = [{pipeline_mode = #tpu.pipeline_mode<synchronous>, transform_indices = @transform_0, window_bounds = array<i64: 256, 256>}, {pipeline_mode = #tpu.pipeline_mode<synchronous>, transform_indices = @transform_1, window_bounds = array<i64: 8, 256>}, {pipeline_mode = #tpu.pipeline_mode<synchronous>, transform_indices = @transform_2, window_bounds = array<i64: 32, 8>}, {pipeline_mode = #tpu.pipeline_mode<synchronous>, transform_indices = @transform_3, window_bounds = array<i64: 32, 1>}, {pipeline_mode = #tpu.pipeline_mode<synchronous>, transform_indices = @transform_4, window_bounds = array<i64: 16, 32>}, {pipeline_mode = #tpu.pipeline_mode<synchronous>, transform_indices = @transform_5, window_bounds = array<i64: 16, 1>}, {pipeline_mode = #tpu.pipeline_mode<synchronous>, transform_indices = @transform_6, window_bounds = array<i64: 4, 16>}, {pipeline_mode = #tpu.pipeline_mode<synchronous>, transform_indices = @transform_7, window_bounds = array<i64: 4, 1>}, {pipeline_mode = #tpu.pipeline_mode<synchronous>, transform_indices = @transform_8, window_bounds = array<i64: 4, 256>}, {transform_indices = @transform_9, window_bounds = array<i64: 1>}]} {
    %c128_i32 = arith.constant 128 : i32
    %0 = arith.muli %arg1, %c128_i32 : i32
    %1 = tpu.assume_multiple %0, 128 : i32
    %c128_i32_0 = arith.constant 128 : i32
    %2 = arith.muli %arg2, %c128_i32_0 : i32
    %3 = tpu.assume_multiple %2, 128 : i32
    %4 = arith.index_cast %3 : i32 to index
    %5 = arith.index_cast %1 : i32 to index
    %6 = vector.load %arg3[%4, %5] : memref<256x256xbf16, #tpu.memory_space<vmem>>, vector<128x128xbf16>
    %c0_i32 = arith.constant 0 : i32
    %7 = arith.cmpi eq, %arg1, %c0_i32 : i32
    %c0_i32_1 = arith.constant 0 : i32
    %8 = arith.cmpi eq, %arg2, %c0_i32_1 : i32
    %9 = arith.andi %7, %8 : i1
    %10 = arith.extui %9 : i1 to i32
    %c0_i32_2 = arith.constant 0 : i32
    %11 = arith.cmpi ne, %10, %c0_i32_2 : i32
    scf.if %11 {
      %c0_i32_13 = arith.constant 0 : i32
      %31 = arith.cmpi eq, %arg0, %c0_i32_13 : i32
      %32 = arith.extui %31 : i1 to i32
      %c0_i32_14 = arith.constant 0 : i32
      %33 = arith.cmpi ne, %32, %c0_i32_14 : i32
      scf.if %33 {
        %c0 = arith.constant 0 : index
        %c0_19 = arith.constant 0 : index
        %40 = vector.load %arg5[%c0, %c0_19] : memref<32x8xbf16, #tpu.memory_space<vmem>>, vector<32x8xbf16>
        %c0_20 = arith.constant 0 : index
        %c0_21 = arith.constant 0 : index
        %41 = vector.load %arg4[%c0_20, %c0_21] : memref<8x256xbf16, #tpu.memory_space<vmem>>, vector<8x256xbf16>
        %cst = arith.constant dense<0.000000e+00> : vector<32x256xf32>
        %42 = tpu.matmul %40, %41, %cst {dimension_numbers = #tpu.dot_dimension_numbers<[1], [0], [0], [1], [0, 0, 1, 1], [], []>} : vector<32x8xbf16>, vector<8x256xbf16>, vector<32x256xf32> -> vector<32x256xf32>
        %43 = arith.truncf %42 : vector<32x256xf32> to vector<32x256xbf16>
        %c0_22 = arith.constant 0 : index
        %c0_23 = arith.constant 0 : index
        %44 = vector.load %arg13[%c0_22, %c0_23] : memref<32x256xbf16, #tpu.memory_space<vmem>>, vector<32x256xbf16>
        tpu.vector_store %arg13[%c0_22, %c0_23], %43 {strides = array<i32>} : memref<32x256xbf16, #tpu.memory_space<vmem>>, vector<32x256xbf16>,
      } else {
      }
      %c1_i32_15 = arith.constant 1 : i32
      %34 = arith.cmpi eq, %arg0, %c1_i32_15 : i32
      %35 = arith.extui %34 : i1 to i32
      %c0_i32_16 = arith.constant 0 : i32
      %36 = arith.cmpi ne, %35, %c0_i32_16 : i32
      scf.if %36 {
        %c0 = arith.constant 0 : index
        %c0_19 = arith.constant 0 : index
        %40 = vector.load %arg7[%c0, %c0_19] : memref<16x32xbf16, #tpu.memory_space<vmem>>, vector<16x32xbf16>
        %c0_20 = arith.constant 0 : index
        %c0_21 = arith.constant 0 : index
        %41 = vector.load %arg14[%c0_20, %c0_21] : memref<32x256xbf16, #tpu.memory_space<vmem>>, vector<32x256xbf16>
        %cst = arith.constant dense<0.000000e+00> : vector<16x256xf32>
        %42 = tpu.matmul %40, %41, %cst {dimension_numbers = #tpu.dot_dimension_numbers<[1], [0], [0], [1], [0, 0, 1, 1], [], []>} : vector<16x32xbf16>, vector<32x256xbf16>, vector<16x256xf32> -> vector<16x256xf32>
        %43 = arith.truncf %42 : vector<16x256xf32> to vector<16x256xbf16>
        %c0_22 = arith.constant 0 : index
        %c0_23 = arith.constant 0 : index
        %44 = vector.load %arg13[%c0_22, %c0_23] : memref<32x256xbf16, #tpu.memory_space<vmem>>, vector<16x256xbf16>
        tpu.vector_store %arg13[%c0_22, %c0_23], %43 {strides = array<i32>} : memref<32x256xbf16, #tpu.memory_space<vmem>>, vector<16x256xbf16>,
      } else {
      }
      %c2_i32_17 = arith.constant 2 : i32
      %37 = arith.cmpi eq, %arg0, %c2_i32_17 : i32
      %38 = arith.extui %37 : i1 to i32
      %c0_i32_18 = arith.constant 0 : i32
      %39 = arith.cmpi ne, %38, %c0_i32_18 : i32
      scf.if %39 {
        %c0 = arith.constant 0 : index
        %c0_19 = arith.constant 0 : index
        %40 = vector.load %arg11[%c0, %c0_19] : memref<4x256xf32, #tpu.memory_space<vmem>>, vector<4x256xf32>
        %41 = arith.truncf %40 : vector<4x256xf32> to vector<4x256xbf16>
        %c0_20 = arith.constant 0 : index
        %c0_21 = arith.constant 0 : index
        %42 = vector.load %arg13[%c0_20, %c0_21] : memref<32x256xbf16, #tpu.memory_space<vmem>>, vector<4x256xbf16>
        tpu.vector_store %arg13[%c0_20, %c0_21], %41 {strides = array<i32>} : memref<32x256xbf16, #tpu.memory_space<vmem>>, vector<4x256xbf16>,
        %cst = arith.constant 0.000000e+00 : f32
        %43 = vector.broadcast %cst : f32 to vector<1x1xf32>
        %c0_22 = arith.constant 0 : index
        %c0_23 = arith.constant 0 : index
        %44 = vector.load %arg17[%c0_22, %c0_23] : memref<1x1xf32, #tpu.memory_space<vmem>>, vector<1x1xf32>
        tpu.vector_store %arg17[%c0_22, %c0_23], %43 {strides = array<i32>} : memref<1x1xf32, #tpu.memory_space<vmem>>, vector<1x1xf32>,
      } else {
      }
    } else {
    }
    %c2_i32 = arith.constant 2 : i32
    %12 = arith.cmpi slt, %arg0, %c2_i32 : i32
    %13 = arith.extui %12 : i1 to i32
    %c0_i32_3 = arith.constant 0 : i32
    %14 = arith.cmpi ne, %13, %c0_i32_3 : i32
    scf.if %14 {
      %c0_i32_13 = arith.constant 0 : i32
      %31 = arith.cmpi eq, %arg2, %c0_i32_13 : i32
      %32 = arith.extui %31 : i1 to i32
      %c0_i32_14 = arith.constant 0 : i32
      %33 = arith.cmpi ne, %32, %c0_i32_14 : i32
      scf.if %33 {
        %cst_19 = arith.constant 0.000000e+00 : f32
        %40 = vector.broadcast %cst_19 : f32 to vector<32x128xf32>
        %c0_20 = arith.constant 0 : index
        %c0_21 = arith.constant 0 : index
        %41 = vector.load %arg16[%c0_20, %c0_21] : memref<32x128xf32, #tpu.memory_space<vmem>>, vector<32x128xf32>
        tpu.vector_store %arg16[%c0_20, %c0_21], %40 {strides = array<i32>} : memref<32x128xf32, #tpu.memory_space<vmem>>, vector<32x128xf32>,
      } else {
      }
      %c0 = arith.constant 0 : index
      %c0_15 = arith.constant 0 : index
      %34 = vector.load %arg16[%c0, %c0_15] : memref<32x128xf32, #tpu.memory_space<vmem>>, vector<32x128xf32>
      %c0_16 = arith.constant 0 : index
      %35 = arith.index_cast %3 : i32 to index
      %36 = vector.load %arg13[%c0_16, %35] : memref<32x256xbf16, #tpu.memory_space<vmem>>, vector<32x128xbf16>
      %cst = arith.constant dense<0.000000e+00> : vector<32x128xf32>
      %37 = tpu.matmul %36, %6, %cst {dimension_numbers = #tpu.dot_dimension_numbers<[1], [0], [0], [1], [0, 0, 1, 1], [], []>} : vector<32x128xbf16>, vector<128x128xbf16>, vector<32x128xf32> -> vector<32x128xf32>
      %38 = arith.addf %34, %37 : vector<32x128xf32>
      %c0_17 = arith.constant 0 : index
      %c0_18 = arith.constant 0 : index
      %39 = vector.load %arg16[%c0_17, %c0_18] : memref<32x128xf32, #tpu.memory_space<vmem>>, vector<32x128xf32>
      tpu.vector_store %arg16[%c0_17, %c0_18], %38 {strides = array<i32>} : memref<32x128xf32, #tpu.memory_space<vmem>>, vector<32x128xf32>,
    } else {
    }
    %c0_i32_4 = arith.constant 0 : i32
    %15 = arith.cmpi eq, %arg0, %c0_i32_4 : i32
    %16 = arith.extui %15 : i1 to i32
    %c0_i32_5 = arith.constant 0 : i32
    %17 = arith.cmpi ne, %16, %c0_i32_5 : i32
    scf.if %17 {
      %c0_i32_13 = arith.constant 0 : i32
      %31 = arith.cmpi eq, %arg2, %c0_i32_13 : i32
      %32 = arith.extui %31 : i1 to i32
      %c0_i32_14 = arith.constant 0 : i32
      %33 = arith.cmpi ne, %32, %c0_i32_14 : i32
      scf.if %33 {
        %cst_16 = arith.constant 0.000000e+00 : f32
        %42 = vector.broadcast %cst_16 : f32 to vector<1x128xf32>
        %c0_17 = arith.constant 0 : index
        %43 = arith.index_cast %1 : i32 to index
        %44 = vector.load %arg15[%c0_17, %43] : memref<1x256xf32, #tpu.memory_space<vmem>>, vector<1x128xf32>
        tpu.vector_store %arg15[%c0_17, %43], %42 {strides = array<i32>} : memref<1x256xf32, #tpu.memory_space<vmem>>, vector<1x128xf32>,
      } else {
      }
      %c0 = arith.constant 0 : index
      %34 = arith.index_cast %1 : i32 to index
      %35 = vector.load %arg15[%c0, %34] : memref<1x256xf32, #tpu.memory_space<vmem>>, vector<1x128xf32>
      %36 = arith.extf %6 : vector<128x128xbf16> to vector<128x128xf32>
      %cst = arith.constant dense<0.000000e+00> : vector<128xf32>
      %37 = vector.multi_reduction <add>, %36, %cst [0] : vector<128x128xf32> to vector<128xf32>
      %38 = vector.shape_cast %37 : vector<128xf32> to vector<1x128xf32>
      %39 = arith.addf %35, %38 : vector<1x128xf32>
      %c0_15 = arith.constant 0 : index
      %40 = arith.index_cast %1 : i32 to index
      %41 = vector.load %arg15[%c0_15, %40] : memref<1x256xf32, #tpu.memory_space<vmem>>, vector<1x128xf32>
      tpu.vector_store %arg15[%c0_15, %40], %39 {strides = array<i32>} : memref<1x256xf32, #tpu.memory_space<vmem>>, vector<1x128xf32>,
    } else {
    }
    %c0_i32_6 = arith.constant 0 : i32
    %18 = arith.cmpi eq, %arg0, %c0_i32_6 : i32
    %c1_i32 = arith.constant 1 : i32
    %19 = arith.cmpi eq, %arg2, %c1_i32 : i32
    %20 = arith.andi %18, %19 : i1
    %21 = arith.extui %20 : i1 to i32
    %c0_i32_7 = arith.constant 0 : i32
    %22 = arith.cmpi ne, %21, %c0_i32_7 : i32
    scf.if %22 {
      %c0 = arith.constant 0 : index
      %c0_13 = arith.constant 0 : index
      %31 = vector.load %arg16[%c0, %c0_13] : memref<32x128xf32, #tpu.memory_space<vmem>>, vector<32x128xf32>
      %c0_14 = arith.constant 0 : index
      %c0_15 = arith.constant 0 : index
      %32 = vector.load %arg6[%c0_14, %c0_15] : memref<32x1xf32, #tpu.memory_space<vmem>>, vector<32x1xf32>
      %33 = vector.broadcast %32 : vector<32x1xf32> to vector<32x128xf32>
      %34 = arith.addf %31, %33 : vector<32x128xf32>
      %cst = arith.constant 0.000000e+00 : f32
      %35 = vector.broadcast %cst : f32 to vector<32x128xf32>
      %36 = arith.maximumf %34, %35 : vector<32x128xf32>
      %37 = arith.truncf %36 : vector<32x128xf32> to vector<32x128xbf16>
      %c0_16 = arith.constant 0 : index
      %38 = arith.index_cast %1 : i32 to index
      %39 = vector.load %arg14[%c0_16, %38] : memref<32x256xbf16, #tpu.memory_space<vmem>>, vector<32x128xbf16>
      tpu.vector_store %arg14[%c0_16, %38], %37 {strides = array<i32>} : memref<32x256xbf16, #tpu.memory_space<vmem>>, vector<32x128xbf16>,
    } else {
    }
    %c1_i32_8 = arith.constant 1 : i32
    %23 = arith.cmpi eq, %arg0, %c1_i32_8 : i32
    %c1_i32_9 = arith.constant 1 : i32
    %24 = arith.cmpi eq, %arg2, %c1_i32_9 : i32
    %25 = arith.andi %23, %24 : i1
    %26 = arith.extui %25 : i1 to i32
    %c0_i32_10 = arith.constant 0 : i32
    %27 = arith.cmpi ne, %26, %c0_i32_10 : i32
    scf.if %27 {
      %c0 = arith.constant 0 : index
      %c0_13 = arith.constant 0 : index
      %31 = vector.load %arg16[%c0, %c0_13] : memref<32x128xf32, #tpu.memory_space<vmem>>, vector<16x128xf32>
      %c0_14 = arith.constant 0 : index
      %c0_15 = arith.constant 0 : index
      %32 = vector.load %arg8[%c0_14, %c0_15] : memref<16x1xf32, #tpu.memory_space<vmem>>, vector<16x1xf32>
      %33 = vector.broadcast %32 : vector<16x1xf32> to vector<16x128xf32>
      %34 = arith.addf %31, %33 : vector<16x128xf32>
      %cst = arith.constant 0.000000e+00 : f32
      %35 = vector.broadcast %cst : f32 to vector<16x128xf32>
      %36 = arith.maximumf %34, %35 : vector<16x128xf32>
      %c0_16 = arith.constant 0 : index
      %c0_17 = arith.constant 0 : index
      %37 = vector.load %arg9[%c0_16, %c0_17] : memref<4x16xbf16, #tpu.memory_space<vmem>>, vector<4x16xbf16>
      %38 = arith.truncf %36 : vector<16x128xf32> to vector<16x128xbf16>
      %cst_18 = arith.constant dense<0.000000e+00> : vector<4x128xf32>
      %39 = tpu.matmul %37, %38, %cst_18 {dimension_numbers = #tpu.dot_dimension_numbers<[1], [0], [0], [1], [0, 0, 1, 1], [], []>} : vector<4x16xbf16>, vector<16x128xbf16>, vector<4x128xf32> -> vector<4x128xf32>
      %c0_19 = arith.constant 0 : index
      %c0_20 = arith.constant 0 : index
      %40 = vector.load %arg10[%c0_19, %c0_20] : memref<4x1xf32, #tpu.memory_space<vmem>>, vector<4x1xf32>
      %41 = vector.broadcast %40 : vector<4x1xf32> to vector<4x128xf32>
      %42 = arith.addf %39, %41 : vector<4x128xf32>
      %cst_21 = arith.constant dense<0xFF800000> : vector<128xf32>
      %43 = vector.multi_reduction <maximumf>, %42, %cst_21 [0] : vector<4x128xf32> to vector<128xf32>
      %44 = vector.shape_cast %43 : vector<128xf32> to vector<1x128xf32>
      %45 = vector.broadcast %44 : vector<1x128xf32> to vector<4x128xf32>
      %46 = arith.subf %42, %45 : vector<4x128xf32>
      %47 = math.exp %46 : vector<4x128xf32>
      %cst_22 = arith.constant dense<0.000000e+00> : vector<128xf32>
      %48 = vector.multi_reduction <add>, %47, %cst_22 [0] : vector<4x128xf32> to vector<128xf32>
      %49 = vector.shape_cast %48 : vector<128xf32> to vector<1x128xf32>
      %50 = tpu.reciprocal %49 {approx = true} : vector<1x128xf32> -> vector<1x128xf32>
      %51 = vector.broadcast %50 : vector<1x128xf32> to vector<4x128xf32>
      %52 = arith.mulf %47, %51 : vector<4x128xf32>
      %c0_23 = arith.constant 0 : index
      %53 = arith.index_cast %1 : i32 to index
      %54 = vector.load %arg11[%c0_23, %53] : memref<4x256xf32, #tpu.memory_space<vmem>>, vector<4x128xf32>
      tpu.vector_store %arg11[%c0_23, %53], %52 {strides = array<i32>} : memref<4x256xf32, #tpu.memory_space<vmem>>, vector<4x128xf32>,
    } else {
    }
    %c2_i32_11 = arith.constant 2 : i32
    %28 = arith.cmpi eq, %arg0, %c2_i32_11 : i32
    %29 = arith.extui %28 : i1 to i32
    %c0_i32_12 = arith.constant 0 : i32
    %30 = arith.cmpi ne, %29, %c0_i32_12 : i32
    scf.if %30 {
      %c0 = arith.constant 0 : index
      %31 = arith.index_cast %3 : i32 to index
      %32 = vector.load %arg13[%c0, %31] : memref<32x256xbf16, #tpu.memory_space<vmem>>, vector<4x128xbf16>
      %cst = arith.constant dense<0.000000e+00> : vector<4x128xf32>
      %33 = tpu.matmul %32, %6, %cst {dimension_numbers = #tpu.dot_dimension_numbers<[1], [0], [0], [1], [0, 0, 1, 1], [], []>} : vector<4x128xbf16>, vector<128x128xbf16>, vector<4x128xf32> -> vector<4x128xf32>
      %c0_13 = arith.constant 0 : index
      %c0_14 = arith.constant 0 : index
      %34 = vector.load %arg17[%c0_13, %c0_14] : memref<1x1xf32, #tpu.memory_space<vmem>>, vector<1x1xf32>
      %c0_15 = arith.constant 0 : index
      %35 = arith.index_cast %1 : i32 to index
      %36 = vector.load %arg11[%c0_15, %35] : memref<4x256xf32, #tpu.memory_space<vmem>>, vector<4x128xf32>
      %37 = arith.mulf %36, %33 : vector<4x128xf32>
      %38 = vector.shape_cast %37 : vector<4x128xf32> to vector<1x4x128xf32>
      %cst_16 = arith.constant dense<0.000000e+00> : vector<1xf32>
      %39 = vector.multi_reduction <add>, %38, %cst_16 [1, 2] : vector<1x4x128xf32> to vector<1xf32>
      %40 = vector.shape_cast %39 : vector<1xf32> to vector<1x1x1xf32>
      %41 = vector.extract %40[0, 0, 0] : f32 from vector<1x1x1xf32>
      %42 = vector.broadcast %41 : f32 to vector<1x1xf32>
      %43 = arith.addf %34, %42 : vector<1x1xf32>
      %c0_17 = arith.constant 0 : index
      %c0_18 = arith.constant 0 : index
      %44 = vector.load %arg17[%c0_17, %c0_18] : memref<1x1xf32, #tpu.memory_space<vmem>>, vector<1x1xf32>
      tpu.vector_store %arg17[%c0_17, %c0_18], %43 {strides = array<i32>} : memref<1x1xf32, #tpu.memory_space<vmem>>, vector<1x1xf32>,
      %c1_i32_19 = arith.constant 1 : i32
      %45 = arith.cmpi eq, %arg1, %c1_i32_19 : i32
      %c1_i32_20 = arith.constant 1 : i32
      %46 = arith.cmpi eq, %arg2, %c1_i32_20 : i32
      %47 = arith.andi %45, %46 : i1
      %48 = arith.extui %47 : i1 to i32
      %c0_i32_21 = arith.constant 0 : i32
      %49 = arith.cmpi ne, %48, %c0_i32_21 : i32
      scf.if %49 {
        %c0_22 = arith.constant 0 : index
        %c0_23 = arith.constant 0 : index
        %50 = vector.load %arg11[%c0_22, %c0_23] : memref<4x256xf32, #tpu.memory_space<vmem>>, vector<4x256xf32>
        %c0_24 = arith.constant 0 : index
        %c0_25 = arith.constant 0 : index
        %51 = vector.load %arg15[%c0_24, %c0_25] : memref<1x256xf32, #tpu.memory_space<vmem>>, vector<1x256xf32>
        %52 = arith.mulf %50, %50 : vector<4x256xf32>
        %cst_26 = arith.constant dense<0.000000e+00> : vector<256xf32>
        %53 = vector.multi_reduction <add>, %52, %cst_26 [0] : vector<4x256xf32> to vector<256xf32>
        %54 = vector.shape_cast %53 : vector<256xf32> to vector<1x256xf32>
        %55 = arith.mulf %51, %54 : vector<1x256xf32>
        %56 = vector.shape_cast %55 : vector<1x256xf32> to vector<1x1x256xf32>
        %cst_27 = arith.constant dense<0.000000e+00> : vector<1xf32>
        %57 = vector.multi_reduction <add>, %56, %cst_27 [1, 2] : vector<1x1x256xf32> to vector<1xf32>
        %58 = vector.shape_cast %57 : vector<1xf32> to vector<1x1x1xf32>
        %59 = vector.extract %58[0, 0, 0] : f32 from vector<1x1x1xf32>
        %c0_28 = arith.constant 0 : index
        %c0_29 = arith.constant 0 : index
        %60 = vector.load %arg17[%c0_28, %c0_29] : memref<1x1xf32, #tpu.memory_space<vmem>>, vector<1x1xf32>
        %61 = vector.extract %60[0, 0] : f32 from vector<1x1xf32>
        %62 = arith.divf %61, %59 : f32
        %cst_30 = arith.constant 0.000000e+00 : f32
        %63 = arith.subf %cst_30, %62 : f32
        %cst_31 = arith.constant dense<0.000000e+00> : vector<4x4xf32>
        %64 = tpu.matmul %50, %50, %cst_31 {dimension_numbers = #tpu.dot_dimension_numbers<[1], [1], [0], [0], [0, 0, 1, 0], [], []>} : vector<4x256xf32>, vector<4x256xf32>, vector<4x4xf32> -> vector<4x4xf32>
        %65 = tpu.iota {dimensions = array<i32: 0>} : vector<4x4xi32>
        %66 = tpu.iota {dimensions = array<i32: 1>} : vector<4x4xi32>
        %67 = arith.cmpi eq, %65, %66 : vector<4x4xi32>
        %68 = arith.extui %67 : vector<4x4xi1> to vector<4x4xi32>
        %69 = arith.sitofp %68 : vector<4x4xi32> to vector<4x4xf32>
        %70 = arith.mulf %64, %64 : vector<4x4xf32>
        %71 = vector.shape_cast %70 : vector<4x4xf32> to vector<1x4x4xf32>
        %cst_32 = arith.constant dense<0.000000e+00> : vector<1xf32>
        %72 = vector.multi_reduction <add>, %71, %cst_32 [1, 2] : vector<1x4x4xf32> to vector<1xf32>
        %73 = vector.shape_cast %72 : vector<1xf32> to vector<1x1x1xf32>
        %74 = vector.extract %73[0, 0, 0] : f32 from vector<1x1x1xf32>
        %75 = math.rsqrt %74 : f32
        %76 = vector.broadcast %75 : f32 to vector<4x4xf32>
        %77 = arith.mulf %64, %76 : vector<4x4xf32>
        %cst_33 = arith.constant 5.000000e-01 : f32
        %78 = vector.broadcast %cst_33 : f32 to vector<4x4xf32>
        %79 = arith.mulf %69, %78 : vector<4x4xf32>
        %80 = arith.subf %77, %79 : vector<4x4xf32>
        %81 = arith.mulf %80, %80 : vector<4x4xf32>
        %82 = vector.shape_cast %81 : vector<4x4xf32> to vector<1x4x4xf32>
        %cst_34 = arith.constant dense<0.000000e+00> : vector<1xf32>
        %83 = vector.multi_reduction <add>, %82, %cst_34 [1, 2] : vector<1x4x4xf32> to vector<1xf32>
        %84 = vector.shape_cast %83 : vector<1xf32> to vector<1x1x1xf32>
        %85 = vector.extract %84[0, 0, 0] : f32 from vector<1x1x1xf32>
        %86 = math.sqrt %85 : f32
        %87 = arith.addf %63, %86 : f32
        %c0_35 = arith.constant 0 : index
        %88 = memref.load %arg12[%c0_35] : memref<1xf32, #tpu.memory_space<smem>>
        memref.store %87, %arg12[%c0_35] : memref<1xf32, #tpu.memory_space<smem>>
      } else {
      }
    } else {
    }
    return
  }
  func.func @transform_0(%arg0: i32, %arg1: i32, %arg2: i32) -> (i32, i32) {
    %c0_i32 = arith.constant 0 : i32
    %c0_i32_0 = arith.constant 0 : i32
    %c0_i32_1 = arith.constant 0 : i32
    return %c0_i32, %c0_i32_0 : i32, i32
  }
  func.func @transform_1(%arg0: i32, %arg1: i32, %arg2: i32) -> (i32, i32) {
    %c0_i32 = arith.constant 0 : i32
    %c0_i32_0 = arith.constant 0 : i32
    %c0_i32_1 = arith.constant 0 : i32
    return %c0_i32, %c0_i32_0 : i32, i32
  }
  func.func @transform_2(%arg0: i32, %arg1: i32, %arg2: i32) -> (i32, i32) {
    %c0_i32 = arith.constant 0 : i32
    %c0_i32_0 = arith.constant 0 : i32
    %c0_i32_1 = arith.constant 0 : i32
    return %c0_i32, %c0_i32_0 : i32, i32
  }
  func.func @transform_3(%arg0: i32, %arg1: i32, %arg2: i32) -> (i32, i32) {
    %c0_i32 = arith.constant 0 : i32
    %c0_i32_0 = arith.constant 0 : i32
    %c0_i32_1 = arith.constant 0 : i32
    return %c0_i32, %c0_i32_0 : i32, i32
  }
  func.func @transform_4(%arg0: i32, %arg1: i32, %arg2: i32) -> (i32, i32) {
    %c0_i32 = arith.constant 0 : i32
    %c0_i32_0 = arith.constant 0 : i32
    %c0_i32_1 = arith.constant 0 : i32
    return %c0_i32, %c0_i32_0 : i32, i32
  }
  func.func @transform_5(%arg0: i32, %arg1: i32, %arg2: i32) -> (i32, i32) {
    %c0_i32 = arith.constant 0 : i32
    %c0_i32_0 = arith.constant 0 : i32
    %c0_i32_1 = arith.constant 0 : i32
    return %c0_i32, %c0_i32_0 : i32, i32
  }
  func.func @transform_6(%arg0: i32, %arg1: i32, %arg2: i32) -> (i32, i32) {
    %c0_i32 = arith.constant 0 : i32
    %c0_i32_0 = arith.constant 0 : i32
    %c0_i32_1 = arith.constant 0 : i32
    return %c0_i32, %c0_i32_0 : i32, i32
  }
  func.func @transform_7(%arg0: i32, %arg1: i32, %arg2: i32) -> (i32, i32) {
    %c0_i32 = arith.constant 0 : i32
    %c0_i32_0 = arith.constant 0 : i32
    %c0_i32_1 = arith.constant 0 : i32
    return %c0_i32, %c0_i32_0 : i32, i32
  }
  func.func @transform_8(%arg0: i32, %arg1: i32, %arg2: i32) -> (i32, i32) {
    %c0_i32 = arith.constant 0 : i32
    %c0_i32_0 = arith.constant 0 : i32
    %c0_i32_1 = arith.constant 0 : i32
    return %c0_i32, %c0_i32_0 : i32, i32
  }
  func.func @transform_9(%arg0: i32, %arg1: i32, %arg2: i32) -> i32 {
    %c0_i32 = arith.constant 0 : i32
    %c0_i32_0 = arith.constant 0 : i32
    return %c0_i32 : i32
  }
}

</mosaic_0001>

<llo_original>
// kernel: tpu_custom_call.1
$region0: #{tpu_custom_call.1}
  #allocation0 [shape = 'u32[]', space=smem, size = 0x4, offset = 0x4, fixed_abs, tag = 'smem constant byte address 0x4 - core index']
  #allocation1 [shape = 'u32[72,128]{1,0:T(1,128)}', space=vmem, size = 0x9000, scoped, tag = 'internal scratch']
  #allocation2 [shape = 'bf16[32,256]{1,0:T(8,128)(2,1)}', space=vmem, size = 0x4000, scoped, tag = 'scratch operand']
  #allocation3 [shape = 'bf16[32,256]{1,0:T(8,128)(2,1)}', space=vmem, size = 0x4000, scoped, tag = 'scratch operand']
  #allocation4 [shape = 'f32[1,256]{1,0:T(1,128)}', space=vmem, size = 0x400, scoped, tag = 'scratch operand']
  #allocation5 [shape = 'f32[32,128]{1,0:T(8,128)}', space=vmem, size = 0x4000, scoped, tag = 'scratch operand']
  #allocation6 [shape = 'f32[1,1]{1,0:T(1,128)}', space=vmem, size = 0x200, scoped, tag = 'scratch operand']
  %s0 = inlined_call_operand.hbm [shape: bf16[256,256], index: 0, kind: input, shape index: {}]
  %s1 = inlined_call_operand.vmem [shape: bf16[8,256], index: 1, kind: input, shape index: {}]
  %s2 = inlined_call_operand.vmem [shape: bf16[32,8], index: 2, kind: input, shape index: {}]
  %s3 = inlined_call_operand.vmem [shape: f32[32,1], index: 3, kind: input, shape index: {}]
  %s4 = inlined_call_operand.vmem [shape: bf16[16,32], index: 4, kind: input, shape index: {}]
  %s5 = inlined_call_operand.vmem [shape: f32[16,1], index: 5, kind: input, shape index: {}]
  %s6 = inlined_call_operand.vmem [shape: bf16[4,16], index: 6, kind: input, shape index: {}]
  %s7 = inlined_call_operand.vmem [shape: f32[4,1], index: 7, kind: input, shape index: {}]
  %s8 = inlined_call_operand.hbm [shape: f32[4,256], index: 8, kind: output, shape index: {0}]
  %s9 = inlined_call_operand.hbm [shape: f32[1], index: 9, kind: output, shape index: {1}]
  %10 = xla_tuple %s8, %s9
  %s11 = sld [smem:[#allocation0]]
  $region125: #{tpu_custom_call.1} parent=0
    _
  %s13 = ssub.s32 1, %s11
  %s14 = scalar_select 0, %s13, %s11
  $region1: #{tpu_custom_call.1} parent=0
    #allocation7 [shape = 'u8[131072]{0}', space=vmem, size = 0x20000, scoped, tag = 'input window, operand 0, single buffered']
    #allocation8 [shape = 's32[2]{0}', space=sflag, size = 0x8, scoped, tag = 'scoped memory for tpu_custom_call.1']
    #allocation9 [shape = 's32[2]{0}', space=sflag, size = 0x8, scoped, tag = 'scoped memory for tpu_custom_call.1']
    #allocation10 [shape = 's32[2]{0}', space=sflag, size = 0x8, scoped, tag = 'scoped memory for tpu_custom_call.1']
    #allocation11 [shape = 'u8[4096]{0}', space=vmem, size = 0x1000, scoped, tag = 'output window, operand 0, single buffered']
    #allocation12 [shape = 'u8[512]{0}', space=smem, size = 0x200, scoped, tag = 'output window, operand 1, single buffered']
    %15 = vsyncpa [#allocation8], 0
    %16 = vsyncpa [#allocation9], 0
    %17 = vsyncpa [#allocation10], 0
    loop: start=0, step=1, limit=14
    $region2: #{tpu_custom_call.1} parent=1 // loop_pre_header
      _
    $region3: #{tpu_custom_call.1} parent=1 // loop_header
      %s19 = sphi 0, %s23
      %p20 = scmp.ge.s32.totalorder %s19, 14
      %s26 = sphi 0, %s45
      %s27 = sphi 0, %s41
      %s28 = sphi 0, %s37
      %s29 = sphi 0, %s26
      %s30 = sphi 0, %s27
      %s31 = sphi 0, %s28
      %s32 = sphi 0, %s29
      %s33 = sphi 0, %s30
      %s34 = sphi 0, %s31
      %s46 = sphi 0, %s46
      %s48 = sphi 0, %s46
      %s49 = sphi 0, %s48
      %s63 = sphi 0, %s49
      %s67 = sphi 0, %s67
      %s69 = sphi 0, %s67
      %s70 = sphi 0, %s69
      %s84 = sphi 0, %s70
      %s88 = sphi 0, %s88
      %s90 = sphi 0, %s88
      %s91 = sphi 0, %s90
      %s105 = sphi 0, %s91
      %s109 = sphi 0, %s109
      %s111 = sphi 0, %s109
      %s112 = sphi 0, %s111
      %s126 = sphi 0, %s112
      %s130 = sphi 0, %s130
      %s132 = sphi 0, %s130
      %s133 = sphi 0, %s132
      %s147 = sphi 0, %s133
      %s151 = sphi 0, %s151
      %s153 = sphi 0, %s151
      %s154 = sphi 0, %s153
      %s168 = sphi 0, %s154
      %s172 = sphi 0, %s172
      %s174 = sphi 0, %s172
      %s175 = sphi 0, %s174
      %s189 = sphi 0, %s175
      %s193 = sphi 0, %s193
      %s195 = sphi 0, %s193
      %s196 = sphi 0, %s195
      %s210 = sphi 0, %s196
      %s214 = sphi 0, %s214
      %s216 = sphi 0, %s214
      %s217 = sphi 0, %s216
      %s231 = sphi 0, %s217
      %s235 = sphi 0, %s235
      %s237 = sphi 0, %s235
      %s238 = sphi 0, %s237
      %s252 = sphi 0, %s238
    $region4: #{tpu_custom_call.1} parent=1 // loop_header_branch
      %22 = sbr.rel (%p20) target = $region8
    $region5: #{tpu_custom_call.1} parent=1 // loop_body
      %s24 = ssub.s32 %s19, 1
      %s25 = ssub.s32 %s19, 2
      %s35 = sadd.s32 1, %s28
      %p36 = scmp.ge.s32.totalorder %s35, 2
      %s37 = scalar_select %p36, 0, %s35
      %s38 = sadd.s32 1, %s27
      %s39 = scalar_select %p36, %s38, %s27
      %p40 = scmp.ge.s32.totalorder %s39, 2
      %s41 = scalar_select %p40, 0, %s39
      %s42 = sadd.s32 1, %s26
      %s43 = scalar_select %p40, %s42, %s26
      %p44 = scmp.ge.s32.totalorder %s43, 3
      %s45 = scalar_select %p44, 0, %s43
      %s47 = sadd.s32 %s46, 1
      %p50 = scmp.eq.s32.totalorder %s19, 11
      %p51 = scmp.ne.s32.totalorder %s46, %s48
      %p52 = scmp.eq.s32.totalorder %s19, 0
      %p53 = por %p51, %p52
      %p54 = scmp.ne.s32.totalorder %s46, %s48
      %p55 = scmp.eq.s32.totalorder %s24, 11
      %p56 = por %p54, %p55
      %p57 = scmp.ne.s32.totalorder %s48, %s49
      %p58 = scmp.eq.s32.totalorder %s24, 0
      %p59 = por %p57, %p58
      %p60 = scmp.ne.s32.totalorder %s48, %s49
      %p61 = scmp.eq.s32.totalorder %s25, 11
      %p62 = por %p60, %p61
      %p64 = scmp.ne.s32.totalorder %s49, %s63
      %p65 = scmp.eq.s32.totalorder %s25, 0
      %p66 = por %p64, %p65
      %s68 = sadd.s32 %s67, 1
      %p71 = scmp.eq.s32.totalorder %s19, 11
      %p72 = scmp.ne.s32.totalorder %s67, %s69
      %p73 = scmp.eq.s32.totalorder %s19, 0
      %p74 = por %p72, %p73
      %p75 = scmp.ne.s32.totalorder %s67, %s69
      %p76 = scmp.eq.s32.totalorder %s24, 11
      %p77 = por %p75, %p76
      %p78 = scmp.ne.s32.totalorder %s69, %s70
      %p79 = scmp.eq.s32.totalorder %s24, 0
      %p80 = por %p78, %p79
      %p81 = scmp.ne.s32.totalorder %s69, %s70
      %p82 = scmp.eq.s32.totalorder %s25, 11
      %p83 = por %p81, %p82
      %p85 = scmp.ne.s32.totalorder %s70, %s84
      %p86 = scmp.eq.s32.totalorder %s25, 0
      %p87 = por %p85, %p86
      %s89 = sadd.s32 %s88, 1
      %p92 = scmp.eq.s32.totalorder %s19, 11
      %p93 = scmp.ne.s32.totalorder %s88, %s90
      %p94 = scmp.eq.s32.totalorder %s19, 0
      %p95 = por %p93, %p94
      %p96 = scmp.ne.s32.totalorder %s88, %s90
      %p97 = scmp.eq.s32.totalorder %s24, 11
      %p98 = por %p96, %p97
      %p99 = scmp.ne.s32.totalorder %s90, %s91
      %p100 = scmp.eq.s32.totalorder %s24, 0
      %p101 = por %p99, %p100
      %p102 = scmp.ne.s32.totalorder %s90, %s91
      %p103 = scmp.eq.s32.totalorder %s25, 11
      %p104 = por %p102, %p103
      %p106 = scmp.ne.s32.totalorder %s91, %s105
      %p107 = scmp.eq.s32.totalorder %s25, 0
      %p108 = por %p106, %p107
      %s110 = sadd.s32 %s109, 1
      %p113 = scmp.eq.s32.totalorder %s19, 11
      %p114 = scmp.ne.s32.totalorder %s109, %s111
      %p115 = scmp.eq.s32.totalorder %s19, 0
      %p116 = por %p114, %p115
      %p117 = scmp.ne.s32.totalorder %s109, %s111
      %p118 = scmp.eq.s32.totalorder %s24, 11
      %p119 = por %p117, %p118
      %p120 = scmp.ne.s32.totalorder %s111, %s112
      %p121 = scmp.eq.s32.totalorder %s24, 0
      %p122 = por %p120, %p121
      %p123 = scmp.ne.s32.totalorder %s111, %s112
      %p124 = scmp.eq.s32.totalorder %s25, 11
      %p125 = por %p123, %p124
      %p127 = scmp.ne.s32.totalorder %s112, %s126
      %p128 = scmp.eq.s32.totalorder %s25, 0
      %p129 = por %p127, %p128
      %s131 = sadd.s32 %s130, 1
      %p134 = scmp.eq.s32.totalorder %s19, 11
      %p135 = scmp.ne.s32.totalorder %s130, %s132
      %p136 = scmp.eq.s32.totalorder %s19, 0
      %p137 = por %p135, %p136
      %p138 = scmp.ne.s32.totalorder %s130, %s132
      %p139 = scmp.eq.s32.totalorder %s24, 11
      %p140 = por %p138, %p139
      %p141 = scmp.ne.s32.totalorder %s132, %s133
      %p142 = scmp.eq.s32.totalorder %s24, 0
      %p143 = por %p141, %p142
      %p144 = scmp.ne.s32.totalorder %s132, %s133
      %p145 = scmp.eq.s32.totalorder %s25, 11
      %p146 = por %p144, %p145
      %p148 = scmp.ne.s32.totalorder %s133, %s147
      %p149 = scmp.eq.s32.totalorder %s25, 0
      %p150 = por %p148, %p149
      %s152 = sadd.s32 %s151, 1
      %p155 = scmp.eq.s32.totalorder %s19, 11
      %p156 = scmp.ne.s32.totalorder %s151, %s153
      %p157 = scmp.eq.s32.totalorder %s19, 0
      %p158 = por %p156, %p157
      %p159 = scmp.ne.s32.totalorder %s151, %s153
      %p160 = scmp.eq.s32.totalorder %s24, 11
      %p161 = por %p159, %p160
      %p162 = scmp.ne.s32.totalorder %s153, %s154
      %p163 = scmp.eq.s32.totalorder %s24, 0
      %p164 = por %p162, %p163
      %p165 = scmp.ne.s32.totalorder %s153, %s154
      %p166 = scmp.eq.s32.totalorder %s25, 11
      %p167 = por %p165, %p166
      %p169 = scmp.ne.s32.totalorder %s154, %s168
      %p170 = scmp.eq.s32.totalorder %s25, 0
      %p171 = por %p169, %p170
      %s173 = sadd.s32 %s172, 1
      %p176 = scmp.eq.s32.totalorder %s19, 11
      %p177 = scmp.ne.s32.totalorder %s172, %s174
      %p178 = scmp.eq.s32.totalorder %s19, 0
      %p179 = por %p177, %p178
      %p180 = scmp.ne.s32.totalorder %s172, %s174
      %p181 = scmp.eq.s32.totalorder %s24, 11
      %p182 = por %p180, %p181
      %p183 = scmp.ne.s32.totalorder %s174, %s175
      %p184 = scmp.eq.s32.totalorder %s24, 0
      %p185 = por %p183, %p184
      %p186 = scmp.ne.s32.totalorder %s174, %s175
      %p187 = scmp.eq.s32.totalorder %s25, 11
      %p188 = por %p186, %p187
      %p190 = scmp.ne.s32.totalorder %s175, %s189
      %p191 = scmp.eq.s32.totalorder %s25, 0
      %p192 = por %p190, %p191
      %s194 = sadd.s32 %s193, 1
      %p197 = scmp.eq.s32.totalorder %s19, 11
      %p198 = scmp.ne.s32.totalorder %s193, %s195
      %p199 = scmp.eq.s32.totalorder %s19, 0
      %p200 = por %p198, %p199
      %p201 = scmp.ne.s32.totalorder %s193, %s195
      %p202 = scmp.eq.s32.totalorder %s24, 11
      %p203 = por %p201, %p202
      %p204 = scmp.ne.s32.totalorder %s195, %s196
      %p205 = scmp.eq.s32.totalorder %s24, 0
      %p206 = por %p204, %p205
      %p207 = scmp.ne.s32.totalorder %s195, %s196
      %p208 = scmp.eq.s32.totalorder %s25, 11
      %p209 = por %p207, %p208
      %p211 = scmp.ne.s32.totalorder %s196, %s210
      %p212 = scmp.eq.s32.totalorder %s25, 0
      %p213 = por %p211, %p212
      %s215 = sadd.s32 %s214, 1
      %p218 = scmp.eq.s32.totalorder %s19, 11
      %p219 = scmp.ne.s32.totalorder %s214, %s216
      %p220 = scmp.eq.s32.totalorder %s19, 0
      %p221 = por %p219, %p220
      %p222 = scmp.ne.s32.totalorder %s214, %s216
      %p223 = scmp.eq.s32.totalorder %s24, 11
      %p224 = por %p222, %p223
      %p225 = scmp.ne.s32.totalorder %s216, %s217
      %p226 = scmp.eq.s32.totalorder %s24, 0
      %p227 = por %p225, %p226
      %p228 = scmp.ne.s32.totalorder %s216, %s217
      %p229 = scmp.eq.s32.totalorder %s25, 11
      %p230 = por %p228, %p229
      %p232 = scmp.ne.s32.totalorder %s217, %s231
      %p233 = scmp.eq.s32.totalorder %s25, 0
      %p234 = por %p232, %p233
      %s236 = sadd.s32 %s235, 1
      %p239 = scmp.eq.s32.totalorder %s19, 11
      %p240 = scmp.ne.s32.totalorder %s235, %s237
      %p241 = scmp.eq.s32.totalorder %s19, 0
      %p242 = por %p240, %p241
      %p243 = scmp.ne.s32.totalorder %s235, %s237
      %p244 = scmp.eq.s32.totalorder %s24, 11
      %p245 = por %p243, %p244
      %p246 = scmp.ne.s32.totalorder %s237, %s238
      %p247 = scmp.eq.s32.totalorder %s24, 0
      %p248 = por %p246, %p247
      %p249 = scmp.ne.s32.totalorder %s237, %s238
      %p250 = scmp.eq.s32.totalorder %s25, 11
      %p251 = por %p249, %p250
      %p253 = scmp.ne.s32.totalorder %s238, %s252
      %p254 = scmp.eq.s32.totalorder %s25, 0
      %p255 = por %p253, %p254
      %p256 = scmp.le.s32.totalorder 1, %s19
      %p257 = scmp.lt.s32.totalorder %s19, 13
      %p258 = pnand %p256, %p257
      %p259 = pneg %p258
      // Predicated region
      $region9: #{tpu_custom_call.1} parent=5 // pred_check
        _
      $region10: #{tpu_custom_call.1} parent=5 // pred_check_branch
        %261 = sbr.rel (%p258) target = $region12
      $region11: #{tpu_custom_call.1} parent=5 // pred_region
        %s262 = ssub.s32 %s19, 1
        // Predicated region
        $region13: #{tpu_custom_call.1} parent=11 // pred_check
          %p263 = pneg %p59
        $region14: #{tpu_custom_call.1} parent=11 // pred_check_branch
          %265 = sbr.rel (%p263) target = $region16
        $region15: #{tpu_custom_call.1} parent=11 // pred_region
          %267 = vsyncadd [#allocation8], 0
          %s268 = sshll.u32 %s0, 4
          %s269 = int_to_ptr.hbm [resolvable:$true] %s268
          %s270 = sshll.u32 [#allocation7], 4
          %s271 = int_to_ptr.vmem [resolvable:$true] %s270
          %276 = dma.hbm_to_vmem [thread:$0]  %s269, 4096, %s271, [#allocation8], 128, 128, 8
        $region16: #{tpu_custom_call.1} parent=11 // pred_fallthru
          _
        // Predicated region
        $region17: #{tpu_custom_call.1} parent=11 // pred_check
          %p277 = pneg %p80
        $region18: #{tpu_custom_call.1} parent=11 // pred_check_branch
          %279 = sbr.rel (%p277) target = $region20
        $region19: #{tpu_custom_call.1} parent=11 // pred_region
          _
        $region20: #{tpu_custom_call.1} parent=11 // pred_fallthru
          _
        // Predicated region
        $region21: #{tpu_custom_call.1} parent=11 // pred_check
          %p280 = pneg %p101
        $region22: #{tpu_custom_call.1} parent=11 // pred_check_branch
          %282 = sbr.rel (%p280) target = $region24
        $region23: #{tpu_custom_call.1} parent=11 // pred_region
          _
        $region24: #{tpu_custom_call.1} parent=11 // pred_fallthru
          _
        // Predicated region
        $region25: #{tpu_custom_call.1} parent=11 // pred_check
          %p283 = pneg %p122
        $region26: #{tpu_custom_call.1} parent=11 // pred_check_branch
          %285 = sbr.rel (%p283) target = $region28
        $region27: #{tpu_custom_call.1} parent=11 // pred_region
          _
        $region28: #{tpu_custom_call.1} parent=11 // pred_fallthru
          _
        // Predicated region
        $region29: #{tpu_custom_call.1} parent=11 // pred_check
          %p286 = pneg %p143
        $region30: #{tpu_custom_call.1} parent=11 // pred_check_branch
          %288 = sbr.rel (%p286) target = $region32
        $region31: #{tpu_custom_call.1} parent=11 // pred_region
          _
        $region32: #{tpu_custom_call.1} parent=11 // pred_fallthru
          _
        // Predicated region
        $region33: #{tpu_custom_call.1} parent=11 // pred_check
          %p289 = pneg %p164
        $region34: #{tpu_custom_call.1} parent=11 // pred_check_branch
          %291 = sbr.rel (%p289) target = $region36
        $region35: #{tpu_custom_call.1} parent=11 // pred_region
          _
        $region36: #{tpu_custom_call.1} parent=11 // pred_fallthru
          _
        // Predicated region
        $region37: #{tpu_custom_call.1} parent=11 // pred_check
          %p292 = pneg %p185
        $region38: #{tpu_custom_call.1} parent=11 // pred_check_branch
          %294 = sbr.rel (%p292) target = $region40
        $region39: #{tpu_custom_call.1} parent=11 // pred_region
          _
        $region40: #{tpu_custom_call.1} parent=11 // pred_fallthru
          _
        // Predicated region
        $region41: #{tpu_custom_call.1} parent=11 // pred_check
          %p295 = pneg %p206
        $region42: #{tpu_custom_call.1} parent=11 // pred_check_branch
          %297 = sbr.rel (%p295) target = $region44
        $region43: #{tpu_custom_call.1} parent=11 // pred_region
          _
        $region44: #{tpu_custom_call.1} parent=11 // pred_fallthru
          _
      $region12: #{tpu_custom_call.1} parent=5 // pred_fallthru
        _
      %p298 = scmp.lt.s32.totalorder %s19, 12
      // Predicated region
      $region45: #{tpu_custom_call.1} parent=5 // pred_check
        %p299 = pneg %p298
      $region46: #{tpu_custom_call.1} parent=5 // pred_check_branch
        %301 = sbr.rel (%p299) target = $region48
      $region47: #{tpu_custom_call.1} parent=5 // pred_region
        _
      $region48: #{tpu_custom_call.1} parent=5 // pred_fallthru
        _
      %p302 = scmp.le.s32.totalorder 1, %s19
      %p303 = scmp.lt.s32.totalorder %s19, 13
      %p304 = pnand %p302, %p303
      %p305 = pneg %p304
      // Predicated region
      $region49: #{tpu_custom_call.1} parent=5 // pred_check
        _
      $region50: #{tpu_custom_call.1} parent=5 // pred_check_branch
        %307 = sbr.rel (%p304) target = $region52
      $region51: #{tpu_custom_call.1} parent=5 // pred_region
        %s308 = ssub.s32 %s19, 1
        // Predicated region
        $region53: #{tpu_custom_call.1} parent=51 // pred_check
          %p309 = pneg %p59
        $region54: #{tpu_custom_call.1} parent=51 // pred_check_branch
          %311 = sbr.rel (%p309) target = $region56
        $region55: #{tpu_custom_call.1} parent=51 // pred_region
          %313 = dma.done [#allocation8], 4096
        $region56: #{tpu_custom_call.1} parent=51 // pred_fallthru
          _
        %p314 = pneg %p59
        %p315 = pneg %p56
        %p316 = pneg %p80
        %p317 = pneg %p77
        %p318 = pneg %p101
        %p319 = pneg %p98
        %p320 = pneg %p122
        %p321 = pneg %p119
        %p322 = pneg %p143
        %p323 = pneg %p140
        %p324 = pneg %p164
        %p325 = pneg %p161
        %p326 = pneg %p185
        %p327 = pneg %p182
        %p328 = pneg %p206
        %p329 = pneg %p203
        %p330 = pneg %p227
        %p331 = pneg %p224
        %p332 = pneg %p248
        %p333 = pneg %p245
        %s335 = smul.u32 %s30, 128
        %s336 = smul.u32 %s31, 128
        %s337 = sshra.s32 %s335, 7
        %s338 = sand.u32 %s335, 127
        %s339 = sshra.s32 %s336, 3
        %s340 = sand.u32 %s336, 7
        %s341 = smul.u32 %s339, 2
        %s342 = sadd.s32 %s337, %s341
        %s343 = smul.addr %s342, 4
        %s344 = scalar_lea.vmem [#allocation7], %s343
        %v345 = vld [vmem:[%s344] sm:$0xf]
        %v346 = vld [vmem:[%s344 + $0x8] sm:$0xf]
        %v347 = vld [vmem:[%s344 + $0x10] sm:$0xf]
        %v348 = vld [vmem:[%s344 + $0x18] sm:$0xf]
        %v349 = vld [vmem:[%s344 + $0x20] sm:$0xf]
        %v350 = vld [vmem:[%s344 + $0x28] sm:$0xf]
        %v351 = vld [vmem:[%s344 + $0x30] sm:$0xf]
        %v352 = vld [vmem:[%s344 + $0x38] sm:$0xf]
        %v353 = vld [vmem:[%s344 + $0x40] sm:$0xf]
        %v354 = vld [vmem:[%s344 + $0x48] sm:$0xf]
        %v355 = vld [vmem:[%s344 + $0x50] sm:$0xf]
        %v356 = vld [vmem:[%s344 + $0x58] sm:$0xf]
        %v357 = vld [vmem:[%s344 + $0x60] sm:$0xf]
        %v358 = vld [vmem:[%s344 + $0x68] sm:$0xf]
        %v359 = vld [vmem:[%s344 + $0x70] sm:$0xf]
        %v360 = vld [vmem:[%s344 + $0x78] sm:$0xf]
        %p361 = scmp.eq.s32.totalorder %s30, 0
        %p362 = scmp.eq.s32.totalorder %s31, 0
        %p363 = pnand %p361, %p362
        %p364 = pneg %p363
        // Predicated region
        $region57: #{tpu_custom_call.1} parent=51 // pred_check
          _
        $region58: #{tpu_custom_call.1} parent=51 // pred_check_branch
          %366 = sbr.rel (%p363) target = $region60
        $region59: #{tpu_custom_call.1} parent=51 // pred_region
          %p367 = scmp.eq.s32.totalorder %s29, 0
          // Predicated region
          $region61: #{tpu_custom_call.1} parent=59 // pred_check
            %p368 = pneg %p367
          $region62: #{tpu_custom_call.1} parent=59 // pred_check_branch
            %370 = sbr.rel (%p368) target = $region64
          $region63: #{tpu_custom_call.1} parent=59 // pred_region
            %v371 = vld [vmem:[%s2] sm:$0xf]
            %v372 = vld [vmem:[%s2 + $0x4] sm:$0xf]
            %v373 = vld [vmem:[%s2 + $0x8] sm:$0xf]
            %v374 = vld [vmem:[%s2 + $0xc] sm:$0xf]
            %v375 = vld [vmem:[%s1] sm:$0xff]
            %v380 = vunpack.c.l.b16 %v371
            %v381 = vunpack.c.l.b16 %v372
            %v382 = vunpack.c.l.b16 %v373
            %v383 = vunpack.c.l.b16 %v374
            %v384 = vpack.c.b16 %v381, %v380
            %v385 = vpack.c.b16 %v383, %v382
            %v387 = vunpack.c.l.b16 %v375
            %v388 = vunpack.c.h.b16 %v375
            %v389 = vpack.c.b16 %v387, %v387
            %v390 = vpack.c.b16 %v388, %v388
            %vm391 = vcmask 64512
            %v393 = vsel %vm391, %v384, 0
            %v396 = vsel %vm391, %v385, 0
            %vm398 = vcmask 1043456
            %v400 = vsel %vm398, %v389, 0
            %v403 = vsel %vm398, %v390, 0
            %405 = vmatpush.bf16.msra.mxu0 0
            %406 = vmatpush.bf16.msra.mxu0 0
            %407 = vmatpush.bf16.msra.mxu0 0
            %408 = vmatpush.bf16.msra.mxu0 0
            %409 = vmatpush.bf16.msra.mxu0 0
            %410 = vmatpush.bf16.msra.mxu0 0
            %411 = vmatpush.bf16.msra.mxu0 0
            %412 = vmatpush.bf16.msra.mxu0 %v400
            %413 = vmatmul.bf16.gmra.mxu0 %v393
            %v414 = vpop.f32.mrf.mxu0
            %v415 = vadd.f32 0.0, %v414
            %v416 = vpop.f32.mrf.mxu0
            %v417 = vadd.f32 0.0, %v416
            %418 = vmatmul.bf16.gmra.mxu0 %v396
            %v419 = vpop.f32.mrf.mxu0
            %v420 = vadd.f32 0.0, %v419
            %v421 = vpop.f32.mrf.mxu0
            %v422 = vadd.f32 0.0, %v421
            %423 = vdwg.mxu0
            %424 = vmatpush.bf16.msra.mxu0 0
            %425 = vmatpush.bf16.msra.mxu0 0
            %426 = vmatpush.bf16.msra.mxu0 0
            %427 = vmatpush.bf16.msra.mxu0 0
            %428 = vmatpush.bf16.msra.mxu0 0
            %429 = vmatpush.bf16.msra.mxu0 0
            %430 = vmatpush.bf16.msra.mxu0 0
            %431 = vmatpush.bf16.msra.mxu0 %v403
            %432 = vmatmul.bf16.gmra.mxu0 %v393
            %v433 = vpop.f32.mrf.mxu0
            %v434 = vadd.f32 0.0, %v433
            %v435 = vpop.f32.mrf.mxu0
            %v436 = vadd.f32 0.0, %v435
            %437 = vmatmul.bf16.gmra.mxu0 %v396
            %v438 = vpop.f32.mrf.mxu0
            %v439 = vadd.f32 0.0, %v438
            %v440 = vpop.f32.mrf.mxu0
            %v441 = vadd.f32 0.0, %v440
            %442 = vdwg.mxu0
            %v443 = vpack.c.bf16 %v434, %v415
            %v444 = vpack.c.bf16 %v436, %v417
            %v445 = vpack.c.bf16 %v439, %v420
            %v446 = vpack.c.bf16 %v441, %v422
            %447 = vst [vmem:[#allocation2] sm:$0xff] %v443
            %448 = vst [vmem:[#allocation2 + $0x8] sm:$0xff] %v444
            %449 = vst [vmem:[#allocation2 + $0x10] sm:$0xff] %v445
            %450 = vst [vmem:[#allocation2 + $0x18] sm:$0xff] %v446
          $region64: #{tpu_custom_call.1} parent=59 // pred_fallthru
            _
          %p451 = scmp.eq.s32.totalorder %s29, 1
          // Predicated region
          $region65: #{tpu_custom_call.1} parent=59 // pred_check
            %p452 = pneg %p451
          $region66: #{tpu_custom_call.1} parent=59 // pred_check_branch
            %454 = sbr.rel (%p452) target = $region68
          $region67: #{tpu_custom_call.1} parent=59 // pred_region
            %v455 = vld [vmem:[%s4] sm:$0xf]
            %v456 = vld [vmem:[%s4 + $0x4] sm:$0xf]
            %v457 = vld [vmem:[#allocation3] sm:$0xff]
            %v458 = vld [vmem:[#allocation3 + $0x8] sm:$0xff]
            %v459 = vld [vmem:[#allocation3 + $0x10] sm:$0xff]
            %v460 = vld [vmem:[#allocation3 + $0x18] sm:$0xff]
            %v463 = vunpack.c.l.b16 %v455
            %v464 = vunpack.c.l.b16 %v456
            %v465 = vpack.c.b16 %v464, %v463
            %v470 = vunpack.c.l.b16 %v457
            %v471 = vunpack.c.h.b16 %v457
            %v472 = vunpack.c.l.b16 %v458
            %v473 = vunpack.c.h.b16 %v458
            %v474 = vunpack.c.l.b16 %v459
            %v475 = vunpack.c.h.b16 %v459
            %v476 = vunpack.c.l.b16 %v460
            %v477 = vunpack.c.h.b16 %v460
            %v478 = vpack.c.b16 %v472, %v470
            %v479 = vpack.c.b16 %v473, %v471
            %v480 = vpack.c.b16 %v476, %v474
            %v481 = vpack.c.b16 %v477, %v475
            %vm486 = vcmask 261120
            %v488 = vsel %vm486, %v465, 0
            %490 = vmatpush.bf16.msra.mxu0 0
            %491 = vmatpush.bf16.msra.mxu0 0
            %492 = vmatpush.bf16.msra.mxu0 0
            %493 = vmatpush.bf16.msra.mxu0 0
            %494 = vmatpush.bf16.msra.mxu0 0
            %495 = vmatpush.bf16.msra.mxu0 0
            %496 = vmatpush.bf16.msra.mxu0 %v480
            %497 = vmatpush.bf16.msra.mxu0 %v478
            %498 = vmatmul.bf16.gmra.mxu0 %v488
            %v499 = vpop.f32.mrf.mxu0
            %v500 = vadd.f32 0.0, %v499
            %v501 = vpop.f32.mrf.mxu0
            %v502 = vadd.f32 0.0, %v501
            %503 = vdwg.mxu0
            %504 = vmatpush.bf16.msra.mxu0 0
            %505 = vmatpush.bf16.msra.mxu0 0
            %506 = vmatpush.bf16.msra.mxu0 0
            %507 = vmatpush.bf16.msra.mxu0 0
            %508 = vmatpush.bf16.msra.mxu0 0
            %509 = vmatpush.bf16.msra.mxu0 0
            %510 = vmatpush.bf16.msra.mxu0 %v481
            %511 = vmatpush.bf16.msra.mxu0 %v479
            %512 = vmatmul.bf16.gmra.mxu0 %v488
            %v513 = vpop.f32.mrf.mxu0
            %v514 = vadd.f32 0.0, %v513
            %v515 = vpop.f32.mrf.mxu0
            %v516 = vadd.f32 0.0, %v515
            %517 = vdwg.mxu0
            %v518 = vpack.c.bf16 %v514, %v500
            %v519 = vpack.c.bf16 %v516, %v502
            %520 = vst [vmem:[#allocation2] sm:$0xff] %v518
            %521 = vst [vmem:[#allocation2 + $0x8] sm:$0xff] %v519
          $region68: #{tpu_custom_call.1} parent=59 // pred_fallthru
            _
          %p522 = scmp.eq.s32.totalorder %s29, 2
          // Predicated region
          $region69: #{tpu_custom_call.1} parent=59 // pred_check
            %p523 = pneg %p522
          $region70: #{tpu_custom_call.1} parent=59 // pred_check_branch
            %525 = sbr.rel (%p523) target = $region72
          $region71: #{tpu_custom_call.1} parent=59 // pred_region
            %v526 = vld [vmem:[#allocation11] sm:$0xff]
            %528 = vst [vmem:[#allocation1] ss:$2 sm:$0xff] %v526
            %v529 = vld.sshfl [vmem:[#allocation1] sm:$0xff pattern:$0x75316420]
            %v530 = vld.sshfl [vmem:[#allocation1 + $0x8] sm:$0xff pattern:$0x75316420]
            %v533 = vpack.c.bf16 %v530, %v529
            %534 = vst [vmem:[#allocation2] sm:$0x33] %v533
            %vm535 = vcmask 0
            %536 = vst.msk [vmem:[#allocation6] sm:$0x1] %vm535, 0.0
          $region72: #{tpu_custom_call.1} parent=59 // pred_fallthru
            _
        $region60: #{tpu_custom_call.1} parent=51 // pred_fallthru
          _
        %p537 = scmp.lt.s32.totalorder %s29, 2
        // Predicated region
        $region73: #{tpu_custom_call.1} parent=51 // pred_check
          %p538 = pneg %p537
        $region74: #{tpu_custom_call.1} parent=51 // pred_check_branch
          %540 = sbr.rel (%p538) target = $region76
        $region75: #{tpu_custom_call.1} parent=51 // pred_region
          // Predicated region
          $region77: #{tpu_custom_call.1} parent=75 // pred_check
            %p541 = pneg %p362
          $region78: #{tpu_custom_call.1} parent=75 // pred_check_branch
            %543 = sbr.rel (%p541) target = $region80
          $region79: #{tpu_custom_call.1} parent=75 // pred_region
            %544 = vst [vmem:[#allocation5] sm:$0xff] 0.0
            %545 = vst [vmem:[#allocation5 + $0x8] sm:$0xff] 0.0
            %546 = vst [vmem:[#allocation5 + $0x10] sm:$0xff] 0.0
            %547 = vst [vmem:[#allocation5 + $0x18] sm:$0xff] 0.0
          $region80: #{tpu_custom_call.1} parent=75 // pred_fallthru
            _
          %v548 = vld [vmem:[#allocation5] sm:$0xff]
          %v549 = vld [vmem:[#allocation5 + $0x8] sm:$0xff]
          %v550 = vld [vmem:[#allocation5 + $0x10] sm:$0xff]
          %v551 = vld [vmem:[#allocation5 + $0x18] sm:$0xff]
          %s552 = sshra.s32 %s336, 7
          %s553 = sand.u32 %s336, 127
          %s554 = smul.addr %s552, 4
          %s555 = scalar_lea.vmem [#allocation2], %s554
          %v556 = vld [vmem:[%s555] sm:$0xf]
          %v557 = vld [vmem:[%s555 + $0x8] sm:$0xf]
          %v558 = vld [vmem:[%s555 + $0x10] sm:$0xf]
          %v559 = vld [vmem:[%s555 + $0x18] sm:$0xf]
          %v564 = vunpack.c.l.b16 %v556
          %v565 = vunpack.c.l.b16 %v557
          %v566 = vunpack.c.l.b16 %v558
          %v567 = vunpack.c.l.b16 %v559
          %v568 = vpack.c.b16 %v565, %v564
          %v569 = vpack.c.b16 %v567, %v566
          %v588 = vunpack.c.l.b16 %v345
          %v589 = vunpack.c.l.b16 %v346
          %v590 = vunpack.c.l.b16 %v347
          %v591 = vunpack.c.l.b16 %v348
          %v592 = vunpack.c.l.b16 %v349
          %v593 = vunpack.c.l.b16 %v350
          %v594 = vunpack.c.l.b16 %v351
          %v595 = vunpack.c.l.b16 %v352
          %v596 = vunpack.c.l.b16 %v353
          %v597 = vunpack.c.l.b16 %v354
          %v598 = vunpack.c.l.b16 %v355
          %v599 = vunpack.c.l.b16 %v356
          %v600 = vunpack.c.l.b16 %v357
          %v601 = vunpack.c.l.b16 %v358
          %v602 = vunpack.c.l.b16 %v359
          %v603 = vunpack.c.l.b16 %v360
          %v604 = vpack.c.b16 %v589, %v588
          %v605 = vpack.c.b16 %v591, %v590
          %v606 = vpack.c.b16 %v593, %v592
          %v607 = vpack.c.b16 %v595, %v594
          %v608 = vpack.c.b16 %v597, %v596
          %v609 = vpack.c.b16 %v599, %v598
          %v610 = vpack.c.b16 %v601, %v600
          %v611 = vpack.c.b16 %v603, %v602
          %620 = vmatpush.bf16.msra.mxu0 %v611
          %621 = vmatpush.bf16.msra.mxu0 %v610
          %622 = vmatpush.bf16.msra.mxu0 %v609
          %623 = vmatpush.bf16.msra.mxu0 %v608
          %624 = vmatpush.bf16.msra.mxu0 %v607
          %625 = vmatpush.bf16.msra.mxu0 %v606
          %626 = vmatpush.bf16.msra.mxu0 %v605
          %627 = vmatpush.bf16.msra.mxu0 %v604
          %628 = vmatmul.bf16.gmra.mxu0 %v568
          %v629 = vpop.f32.mrf.mxu0
          %v630 = vadd.f32 0.0, %v629
          %v631 = vpop.f32.mrf.mxu0
          %v632 = vadd.f32 0.0, %v631
          %633 = vmatmul.bf16.gmra.mxu0 %v569
          %v634 = vpop.f32.mrf.mxu0
          %v635 = vadd.f32 0.0, %v634
          %v636 = vpop.f32.mrf.mxu0
          %v637 = vadd.f32 0.0, %v636
          %638 = vdwg.mxu0
          %v639 = vadd.f32 %v548, %v630
          %v640 = vadd.f32 %v549, %v632
          %v641 = vadd.f32 %v550, %v635
          %v642 = vadd.f32 %v551, %v637
          %643 = vst [vmem:[#allocation5] sm:$0xff] %v639
          %644 = vst [vmem:[#allocation5 + $0x8] sm:$0xff] %v640
          %645 = vst [vmem:[#allocation5 + $0x10] sm:$0xff] %v641
          %646 = vst [vmem:[#allocation5 + $0x18] sm:$0xff] %v642
        $region76: #{tpu_custom_call.1} parent=51 // pred_fallthru
          _
        %p647 = scmp.eq.s32.totalorder %s29, 0
        // Predicated region
        $region81: #{tpu_custom_call.1} parent=51 // pred_check
          %p648 = pneg %p647
        $region82: #{tpu_custom_call.1} parent=51 // pred_check_branch
          %650 = sbr.rel (%p648) target = $region84
        $region83: #{tpu_custom_call.1} parent=51 // pred_region
          // Predicated region
          $region85: #{tpu_custom_call.1} parent=83 // pred_check
            %p651 = pneg %p362
          $region86: #{tpu_custom_call.1} parent=83 // pred_check_branch
            %653 = sbr.rel (%p651) target = $region88
          $region87: #{tpu_custom_call.1} parent=83 // pred_region
            %s654 = scalar_lea.vmem [#allocation4], %s337
            %v655 = vlaneseq
            %vm656 = vcmp.ge.s32.totalorder %v655, 0
            %vm657 = vcmp.lt.s32.totalorder %v655, 128
            %vm658 = vmand %vm656, %vm657
            %659 = vst.msk [vmem:[%s654] sm:$0x1] %vm658, 0.0
          $region88: #{tpu_custom_call.1} parent=83 // pred_fallthru
            _
          %s660 = scalar_lea.vmem [#allocation4], %s337
          %v661 = vld [vmem:[%s660] sm:$0x1]
          %v662 = vunpack.c.l.bf16 %v345
          %v663 = vunpack.c.l.bf16 %v346
          %v664 = vunpack.c.l.bf16 %v347
          %v665 = vunpack.c.l.bf16 %v348
          %v666 = vunpack.c.l.bf16 %v349
          %v667 = vunpack.c.l.bf16 %v350
          %v668 = vunpack.c.l.bf16 %v351
          %v669 = vunpack.c.l.bf16 %v352
          %v670 = vunpack.c.l.bf16 %v353
          %v671 = vunpack.c.l.bf16 %v354
          %v672 = vunpack.c.l.bf16 %v355
          %v673 = vunpack.c.l.bf16 %v356
          %v674 = vunpack.c.l.bf16 %v357
          %v675 = vunpack.c.l.bf16 %v358
          %v676 = vunpack.c.l.bf16 %v359
          %v677 = vunpack.c.l.bf16 %v360
          %v678 = vadd.f32 %v662, %v663
          %v679 = vadd.f32 %v678, %v664
          %v680 = vadd.f32 %v679, %v665
          %v681 = vadd.f32 %v680, %v666
          %v682 = vadd.f32 %v681, %v667
          %v683 = vadd.f32 %v682, %v668
          %v684 = vadd.f32 %v683, %v669
          %v685 = vadd.f32 %v684, %v670
          %v686 = vadd.f32 %v685, %v671
          %v687 = vadd.f32 %v686, %v672
          %v688 = vadd.f32 %v687, %v673
          %v689 = vadd.f32 %v688, %v674
          %v690 = vadd.f32 %v689, %v675
          %v691 = vadd.f32 %v690, %v676
          %v692 = vadd.f32 %v691, %v677
          %v693 = vrot.slane %v692, 4
          %v694 = vadd.f32 %v692, %v693
          %v695 = vrot.slane %v694, 2
          %v696 = vadd.f32 %v694, %v695
          %v697 = vrot.slane %v696, 1
          %v698 = vadd.f32 %v696, %v697
          %v699 = vadd.f32 %v661, %v698
          %v700 = vlaneseq
          %vm701 = vcmp.ge.s32.totalorder %v700, 0
          %vm702 = vcmp.lt.s32.totalorder %v700, 128
          %vm703 = vmand %vm701, %vm702
          %704 = vst.msk [vmem:[%s660] sm:$0x1] %vm703, %v699
        $region84: #{tpu_custom_call.1} parent=51 // pred_fallthru
          _
        %p705 = scmp.eq.s32.totalorder %s31, 1
        %p706 = pnand %p647, %p705
        %p707 = pneg %p706
        // Predicated region
        $region89: #{tpu_custom_call.1} parent=51 // pred_check
          _
        $region90: #{tpu_custom_call.1} parent=51 // pred_check_branch
          %709 = sbr.rel (%p706) target = $region92
        $region91: #{tpu_custom_call.1} parent=51 // pred_region
          %v710 = vld [vmem:[#allocation5] sm:$0xff]
          %v711 = vld [vmem:[#allocation5 + $0x8] sm:$0xff]
          %v712 = vld [vmem:[#allocation5 + $0x10] sm:$0xff]
          %v713 = vld [vmem:[#allocation5 + $0x18] sm:$0xff]
          %v714 = vld [vmem:[%s3] sm:$0xff]
          %v715 = vld [vmem:[%s3 + $0x8] sm:$0xff]
          %v716 = vld [vmem:[%s3 + $0x10] sm:$0xff]
          %v717 = vld [vmem:[%s3 + $0x18] sm:$0xff]
          %719 = vset.pattern.permute.xlu0 0
          %720 = vperm.xlu0 %719, %v714
          %v721 = vpop.permute.xlu0 %720
          %724 = vset.pattern.permute.xlu0 0
          %725 = vperm.xlu0 %724, %v715
          %v726 = vpop.permute.xlu0 %725
          %729 = vset.pattern.permute.xlu0 0
          %730 = vperm.xlu0 %729, %v716
          %v731 = vpop.permute.xlu0 %730
          %734 = vset.pattern.permute.xlu0 0
          %735 = vperm.xlu0 %734, %v717
          %v736 = vpop.permute.xlu0 %735
          %v738 = vadd.f32 %v710, %v721
          %v739 = vadd.f32 %v711, %v726
          %v740 = vadd.f32 %v712, %v731
          %v741 = vadd.f32 %v713, %v736
          %v742 = vmax.f32 %v738, 0.0
          %v743 = vmax.f32 %v739, 0.0
          %v744 = vmax.f32 %v740, 0.0
          %v745 = vmax.f32 %v741, 0.0
          %v746 = vpack.c.bf16 %v742, %v742
          %v747 = vpack.c.bf16 %v743, %v743
          %v748 = vpack.c.bf16 %v744, %v744
          %v749 = vpack.c.bf16 %v745, %v745
          %s750 = smul.addr %s337, 4
          %s751 = scalar_lea.vmem [#allocation3], %s750
          %752 = vst [vmem:[%s751] sm:$0xf] %v746
          %753 = vst [vmem:[%s751 + $0x8] sm:$0xf] %v747
          %754 = vst [vmem:[%s751 + $0x10] sm:$0xf] %v748
          %755 = vst [vmem:[%s751 + $0x18] sm:$0xf] %v749
        $region92: #{tpu_custom_call.1} parent=51 // pred_fallthru
          _
        %p756 = scmp.eq.s32.totalorder %s29, 1
        %p757 = pnand %p756, %p705
        %p758 = pneg %p757
        // Predicated region
        $region93: #{tpu_custom_call.1} parent=51 // pred_check
          _
        $region94: #{tpu_custom_call.1} parent=51 // pred_check_branch
          %760 = sbr.rel (%p757) target = $region96
        $region95: #{tpu_custom_call.1} parent=51 // pred_region
          %v761 = vld [vmem:[#allocation5] sm:$0xff]
          %v762 = vld [vmem:[#allocation5 + $0x8] sm:$0xff]
          %v763 = vld [vmem:[%s5] sm:$0xff]
          %v764 = vld [vmem:[%s5 + $0x8] sm:$0xff]
          %766 = vset.pattern.permute.xlu0 0
          %767 = vperm.xlu0 %766, %v763
          %v768 = vpop.permute.xlu0 %767
          %771 = vset.pattern.permute.xlu0 0
          %772 = vperm.xlu0 %771, %v764
          %v773 = vpop.permute.xlu0 %772
          %v775 = vadd.f32 %v761, %v768
          %v776 = vadd.f32 %v762, %v773
          %v777 = vmax.f32 %v775, 0.0
          %v778 = vmax.f32 %v776, 0.0
          %v779 = vld [vmem:[%s6] sm:$0x3]
          %v780 = vpack.c.bf16 %v778, %v777
          %v781 = vld [vmem:[%s7] sm:$0xf]
          %783 = vset.pattern.permute.xlu0 0
          %784 = vperm.xlu0 %783, %v781
          %v785 = vpop.permute.xlu0 %784
          %vm787 = vcmask 130048
          %v789 = vsel %vm787, %v779, 0
          %791 = vmatpush.bf16.msra.mxu0 0
          %792 = vmatpush.bf16.msra.mxu0 0
          %793 = vmatpush.bf16.msra.mxu0 0
          %794 = vmatpush.bf16.msra.mxu0 0
          %795 = vmatpush.bf16.msra.mxu0 0
          %796 = vmatpush.bf16.msra.mxu0 0
          %797 = vmatpush.bf16.msra.mxu0 0
          %798 = vmatpush.bf16.msra.mxu0 %v780
          %799 = vmatmul.bf16.gmra.mxu0 %v789
          %v800 = vpop.f32.mrf.mxu0
          %v801 = vadd.f32 %v785, %v800
          %v802 = vpop.f32.mrf.mxu0
          %803 = vdwg.mxu0
          %vm804 = vcmask 1043456
          %v805 = vsel %vm804, %v801, -inf
          %v806 = vrot.slane %v805, 4
          %v807 = vmax.f32 %v805, %v806
          %v808 = vrot.slane %v807, 2
          %v809 = vmax.f32 %v807, %v808
          %v810 = vrot.slane %v809, 1
          %v811 = vmax.f32 %v809, %v810
          %v812 = vsub.f32 %v801, %v811
          %v813 = vmul.f32 %v812, 1.442695
          %v814 = vpow.pop %v813
          %v815 = vsel %vm804, %v814, 0.0
          %v816 = vrot.slane %v815, 4
          %v817 = vadd.f32 %v815, %v816
          %v818 = vrot.slane %v817, 2
          %v819 = vadd.f32 %v817, %v818
          %v820 = vrot.slane %v819, 1
          %v821 = vadd.f32 %v819, %v820
          %v822 = vrcp.pop %v821
          %v823 = vmul.f32 %v814, %v822
          %s824 = smul.addr %s337, 4
          %s825 = scalar_lea.vmem [#allocation11], %s824
          %826 = vst [vmem:[%s825] sm:$0xf] %v823
        $region96: #{tpu_custom_call.1} parent=51 // pred_fallthru
          _
        %p827 = scmp.eq.s32.totalorder %s29, 2
        // Predicated region
        $region97: #{tpu_custom_call.1} parent=51 // pred_check
          %p828 = pneg %p827
        $region98: #{tpu_custom_call.1} parent=51 // pred_check_branch
          %830 = sbr.rel (%p828) target = $region100
        $region99: #{tpu_custom_call.1} parent=51 // pred_region
          %s831 = sshra.s32 %s336, 7
          %s832 = sand.u32 %s336, 127
          %s833 = smul.addr %s831, 4
          %s834 = scalar_lea.vmem [#allocation2], %s833
          %v835 = vld [vmem:[%s834] sm:$0x3]
          %v852 = vunpack.c.l.b16 %v345
          %v853 = vunpack.c.l.b16 %v346
          %v854 = vunpack.c.l.b16 %v347
          %v855 = vunpack.c.l.b16 %v348
          %v856 = vunpack.c.l.b16 %v349
          %v857 = vunpack.c.l.b16 %v350
          %v858 = vunpack.c.l.b16 %v351
          %v859 = vunpack.c.l.b16 %v352
          %v860 = vunpack.c.l.b16 %v353
          %v861 = vunpack.c.l.b16 %v354
          %v862 = vunpack.c.l.b16 %v355
          %v863 = vunpack.c.l.b16 %v356
          %v864 = vunpack.c.l.b16 %v357
          %v865 = vunpack.c.l.b16 %v358
          %v866 = vunpack.c.l.b16 %v359
          %v867 = vunpack.c.l.b16 %v360
          %v868 = vpack.c.b16 %v853, %v852
          %v869 = vpack.c.b16 %v855, %v854
          %v870 = vpack.c.b16 %v857, %v856
          %v871 = vpack.c.b16 %v859, %v858
          %v872 = vpack.c.b16 %v861, %v860
          %v873 = vpack.c.b16 %v863, %v862
          %v874 = vpack.c.b16 %v865, %v864
          %v875 = vpack.c.b16 %v867, %v866
          %884 = vmatpush.bf16.msra.mxu0 %v875
          %885 = vmatpush.bf16.msra.mxu0 %v874
          %886 = vmatpush.bf16.msra.mxu0 %v873
          %887 = vmatpush.bf16.msra.mxu0 %v872
          %888 = vmatpush.bf16.msra.mxu0 %v871
          %889 = vmatpush.bf16.msra.mxu0 %v870
          %890 = vmatpush.bf16.msra.mxu0 %v869
          %891 = vmatpush.bf16.msra.mxu0 %v868
          %892 = vmatmul.bf16.gmra.mxu0 %v835
          %v893 = vpop.f32.mrf.mxu0
          %v894 = vadd.f32 0.0, %v893
          %v895 = vpop.f32.mrf.mxu0
          %896 = vdwg.mxu0
          %v897 = vld [vmem:[#allocation6] sm:$0x1]
          %s898 = smul.addr %s337, 4
          %s899 = scalar_lea.vmem [#allocation11], %s898
          %v900 = vld [vmem:[%s899] sm:$0xf]
          %v901 = vmul.f32 %v900, %v894
          %vm902 = vcmask 1043456
          %v903 = vsel %vm902, %v901, 0.0
          %904 = vadd.xlane.f32.xlu0 %v903
          %v905 = vpop.xlane.xlu0 %904
          %v906 = vrot.slane %v905, 4
          %v907 = vadd.f32 %v905, %v906
          %v908 = vrot.slane %v907, 2
          %v909 = vadd.f32 %v907, %v908
          %v910 = vrot.slane %v909, 1
          %v911 = vadd.f32 %v909, %v910
          %s912 = vtos %v911
          %v913 = vstv %s912
          %v914 = vadd.f32 %v897, %v913
          %vm915 = vcmask 0
          %916 = vst.msk [vmem:[#allocation6] sm:$0x1] %vm915, %v914
          %p917 = scmp.eq.s32.totalorder %s30, 1
          %p918 = pnand %p917, %p705
          %p919 = pneg %p918
          // Predicated region
          $region101: #{tpu_custom_call.1} parent=99 // pred_check
            _
          $region102: #{tpu_custom_call.1} parent=99 // pred_check_branch
            %921 = sbr.rel (%p918) target = $region104
          $region103: #{tpu_custom_call.1} parent=99 // pred_region
            %v922 = vld [vmem:[#allocation11] sm:$0xff]
            %v923 = vld [vmem:[#allocation4] sm:$0x3]
            %v924 = vmul.f32 %v922, %v922
            %926 = vst [vmem:[#allocation1] ss:$2 sm:$0xff] %v924
            %v927 = vld.sshfl [vmem:[#allocation1] sm:$0xff pattern:$0x75316420]
            %v928 = vld.sshfl [vmem:[#allocation1 + $0x8] sm:$0xff pattern:$0x75316420]
            %v931 = vsel %vm902, %v927, 0.0
            %v932 = vrot.slane %v931, 4
            %v933 = vadd.f32 %v931, %v932
            %v934 = vrot.slane %v933, 2
            %v935 = vadd.f32 %v933, %v934
            %v936 = vrot.slane %v935, 1
            %v937 = vadd.f32 %v935, %v936
            %v938 = vsel %vm902, %v928, 0.0
            %v939 = vrot.slane %v938, 4
            %v940 = vadd.f32 %v938, %v939
            %v941 = vrot.slane %v940, 2
            %v942 = vadd.f32 %v940, %v941
            %v943 = vrot.slane %v942, 1
            %v944 = vadd.f32 %v942, %v943
            %v947 = vrot.slane %v944, 7
            %vm948 = vcmask 1040384
            %v949 = vsel %vm948, %v937, %v947
            %v951 = vmul.f32 %v923, %v949
            %v953 = vperm.slane %v951, 0
            %v954 = vperm.slane %v951, 1
            %v957 = vsel %vm948, %v953, 0.0
            %v958 = vsel %vm948, %v954, 0.0
            %v959 = vadd.f32 %v957, %v958
            %960 = vadd.xlane.f32.xlu0 %v959
            %v961 = vpop.xlane.xlu0 %960
            %v962 = vrot.slane %v961, 4
            %v963 = vadd.f32 %v961, %v962
            %v964 = vrot.slane %v963, 2
            %v965 = vadd.f32 %v963, %v964
            %v966 = vrot.slane %v965, 1
            %v967 = vadd.f32 %v965, %v966
            %s968 = vtos %v967
            %v969 = vld [vmem:[#allocation6] sm:$0x1]
            %s970 = vtos %v969
            %v971 = vstv %s968
            %v972 = vrcp.pop %v971
            %v973 = vmul.f32 %v971, %v972
            %v974 = vsub.f32 1.0, %v973
            %v975 = vmul.f32 %v972, %v974
            %v976 = vadd.f32 %v972, %v975
            %vm977 = vweird.f32 %v971
            %vm978 = vweird.f32 %v972
            %vm979 = vmor %vm977, %vm978
            %v980 = vsel %vm979, %v972, %v976
            %v981 = vand.u32 2147483647, %v971
            %vm982 = vcmp.eq.f32.partialorder %v981, 8.507059e+37
            %v983 = vand.u32 %v971, 2147483648
            %v984 = vor.u32 1.1754944e-38, %v983
            %v985 = vsel %vm982, %v984, %v980
            %s986 = vtos %v985
            %s987 = smul.f32 %s970, %s986
            %s988 = ssub.f32 0.0, %s987
            %990 = vst [vmem:[#allocation1] ss:$2 sm:$0xff] %v922
            %v991 = vld.sshfl [vmem:[#allocation1] sm:$0xff pattern:$0x75316420]
            %v992 = vld.sshfl [vmem:[#allocation1 + $0x8] sm:$0xff pattern:$0x75316420]
            %995 = vst [vmem:[#allocation1] ss:$2 sm:$0xff] %v922
            %v996 = vld.sshfl [vmem:[#allocation1] sm:$0xff pattern:$0x75316420]
            %v997 = vld.sshfl [vmem:[#allocation1 + $0x8] sm:$0xff pattern:$0x75316420]
            %1000 = vmatpush.xpose.msra.mxu0 0.0
            %1001 = vmatpush.xpose.msra.mxu0 0.0
            %1002 = vmatpush.xpose.msra.mxu0 0.0
            %1003 = vmatpush.xpose.msra.mxu0 0.0
            %1004 = vmatpush.xpose.msra.mxu0 0.0
            %1005 = vmatpush.xpose.msra.mxu0 0.0
            %1006 = vmatpush.xpose.msra.mxu0 0.0
            %1007 = vmatpush.xpose.msra.mxu0 0.0
            %1008 = vmatpush.xpose.msra.mxu0 0.0
            %1009 = vmatpush.xpose.msra.mxu0 0.0
            %1010 = vmatpush.xpose.msra.mxu0 0.0
            %1011 = vmatpush.xpose.msra.mxu0 0.0
            %1012 = vmatpush.xpose.msra.mxu0 0.0
            %1013 = vmatpush.xpose.msra.mxu0 0.0
            %1014 = vmatpush.xpose.msra.mxu0 0.0
            %1015 = vmatpush.xpose.msra.mxu0 %v996
            %1016 = vmatmul.f32.gmra.mxu0 %v991
            %v1017 = vpop.f32.mrf.mxu0
            %v1018 = vadd.f32 0.0, %v1017
            %1019 = vdwg.mxu0
            %1020 = vmatpush.xpose.msra.mxu0 0.0
            %1021 = vmatpush.xpose.msra.mxu0 0.0
            %1022 = vmatpush.xpose.msra.mxu0 0.0
            %1023 = vmatpush.xpose.msra.mxu0 0.0
            %1024 = vmatpush.xpose.msra.mxu0 0.0
            %1025 = vmatpush.xpose.msra.mxu0 0.0
            %1026 = vmatpush.xpose.msra.mxu0 0.0
            %1027 = vmatpush.xpose.msra.mxu0 0.0
            %1028 = vmatpush.xpose.msra.mxu0 0.0
            %1029 = vmatpush.xpose.msra.mxu0 0.0
            %1030 = vmatpush.xpose.msra.mxu0 0.0
            %1031 = vmatpush.xpose.msra.mxu0 0.0
            %1032 = vmatpush.xpose.msra.mxu0 0.0
            %1033 = vmatpush.xpose.msra.mxu0 0.0
            %1034 = vmatpush.xpose.msra.mxu0 0.0
            %1035 = vmatpush.xpose.msra.mxu0 %v997
            %1036 = vmatmul.f32.gmra.mxu0 %v992
            %v1037 = vpop.f32.mrf.mxu0
            %v1038 = vadd.f32 %v1018, %v1037
            %1039 = vdwg.mxu0
            %v1040 = vlaneseq
            %v1041 = vshrl.u32 %v1040, 7
            %v1042 = vlaneseq
            %v1043 = vand.u32 %v1042, 127
            %vm1044 = vcmp.eq.s32.totalorder %v1041, %v1043
            %v1045 = vsel %vm1044, 1, 0
            %v1046 = vcvt.s32.f32 %v1045
            %v1047 = vmul.f32 %v1038, %v1038
            %vm1048 = vcmask 27648
            %v1049 = vsel %vm1048, %v1047, 0.0
            %1050 = vadd.xlane.f32.xlu0 %v1049
            %v1051 = vpop.xlane.xlu0 %1050
            %v1052 = vrot.slane %v1051, 4
            %v1053 = vadd.f32 %v1051, %v1052
            %v1054 = vrot.slane %v1053, 2
            %v1055 = vadd.f32 %v1053, %v1054
            %v1056 = vrot.slane %v1055, 1
            %v1057 = vadd.f32 %v1055, %v1056
            %s1058 = vtos %v1057
            %v1059 = vstv %s1058
            %v1060 = vrsqrt.pop %v1059
            %v1061 = vmul.f32 %v1060, %v1059
            %v1062 = vmul.f32 %v1061, %v1060
            %v1063 = vmul.f32 0.5, %v1062
            %v1064 = vsub.f32 1.5, %v1063
            %v1065 = vmul.f32 %v1060, %v1064
            %vm1066 = vweird.f32 %v1059
            %vm1067 = vweird.f32 %v1060
            %vm1068 = vmor %vm1066, %vm1067
            %v1069 = vsel %vm1068, %v1060, %v1065
            %s1070 = vtos %v1069
            %v1071 = vstv %s1070
            %v1072 = vmul.f32 %v1038, %v1071
            %v1073 = vmul.f32 %v1046, 0.5
            %v1074 = vsub.f32 %v1072, %v1073
            %v1075 = vmul.f32 %v1074, %v1074
            %v1076 = vsel %vm1048, %v1075, 0.0
            %1077 = vadd.xlane.f32.xlu0 %v1076
            %v1078 = vpop.xlane.xlu0 %1077
            %v1079 = vrot.slane %v1078, 4
            %v1080 = vadd.f32 %v1078, %v1079
            %v1081 = vrot.slane %v1080, 2
            %v1082 = vadd.f32 %v1080, %v1081
            %v1083 = vrot.slane %v1082, 1
            %v1084 = vadd.f32 %v1082, %v1083
            %s1085 = vtos %v1084
            %v1086 = vstv %s1085
            %v1087 = vrsqrt.pop %v1086
            %v1088 = vmul.f32 %v1087, %v1086
            %v1089 = vmul.f32 %v1088, %v1087
            %v1090 = vmul.f32 0.5, %v1089
            %v1091 = vsub.f32 1.5, %v1090
            %v1092 = vmul.f32 %v1087, %v1091
            %v1093 = vmul.f32 %v1086, %v1092
            %vm1094 = vcmp.eq.f32.partialorder %v1086, inf
            %v1095 = vsel %vm1094, %v1086, %v1093
            %vm1096 = vcmp.eq.f32.partialorder %v1086, 0.0
            %v1097 = vand.u32 %v1086, 2147483648
            %v1098 = vsel %vm1096, %v1097, %v1095
            %s1099 = vtos %v1098
            %s1100 = sadd.f32 %s988, %s1099
            %s1101 = scalar_lea.smem [#allocation12], 0
            %1102 = sst [smem:[%s1101]] %s1100
          $region104: #{tpu_custom_call.1} parent=99 // pred_fallthru
            _
        $region100: #{tpu_custom_call.1} parent=51 // pred_fallthru
          _
        // Predicated region
        $region105: #{tpu_custom_call.1} parent=51 // pred_check
          %p1103 = pneg %p224
        $region106: #{tpu_custom_call.1} parent=51 // pred_check_branch
          %1105 = sbr.rel (%p1103) target = $region108
        $region107: #{tpu_custom_call.1} parent=51 // pred_region
          %1107 = vsyncadd [#allocation9], 0
          %s1109 = sshll.u32 [#allocation11], 4
          %s1110 = int_to_ptr.vmem [resolvable:$true] %s1109
          %s1111 = sshll.u32 %s8, 4
          %s1112 = int_to_ptr.hbm [resolvable:$true] %s1111
          %1114 = dma.vmem_to_hbm [thread:$0]  %s1110, 128, %s1112, [#allocation9]
        $region108: #{tpu_custom_call.1} parent=51 // pred_fallthru
          _
        // Predicated region
        $region109: #{tpu_custom_call.1} parent=51 // pred_check
          %p1115 = pneg %p245
        $region110: #{tpu_custom_call.1} parent=51 // pred_check_branch
          %1117 = sbr.rel (%p1115) target = $region112
        $region111: #{tpu_custom_call.1} parent=51 // pred_region
          %1119 = vsyncadd [#allocation10], 0
          %s1121 = sshll.u32 %s9, 4
          %s1122 = int_to_ptr.hbm [resolvable:$true] %s1121
          %1124 = dma.smem_to_hbm [#allocation12], 16, %s1122, [#allocation10]
        $region112: #{tpu_custom_call.1} parent=51 // pred_fallthru
          _
        // Predicated region
        $region113: #{tpu_custom_call.1} parent=51 // pred_check
          %p1125 = pneg %p224
        $region114: #{tpu_custom_call.1} parent=51 // pred_check_branch
          %1127 = sbr.rel (%p1125) target = $region116
        $region115: #{tpu_custom_call.1} parent=51 // pred_region
          %1129 = dma.done [#allocation9], 128
        $region116: #{tpu_custom_call.1} parent=51 // pred_fallthru
          _
        // Predicated region
        $region117: #{tpu_custom_call.1} parent=51 // pred_check
          %p1130 = pneg %p245
        $region118: #{tpu_custom_call.1} parent=51 // pred_check_branch
          %1132 = sbr.rel (%p1130) target = $region120
        $region119: #{tpu_custom_call.1} parent=51 // pred_region
          %1134 = dma.done [#allocation10], 16
        $region120: #{tpu_custom_call.1} parent=51 // pred_fallthru
          _
        %1135 = sfence
      $region52: #{tpu_custom_call.1} parent=5 // pred_fallthru
        _
      %p1136 = scmp.le.s32.totalorder 2, %s19
      // Predicated region
      $region121: #{tpu_custom_call.1} parent=5 // pred_check
        %p1137 = pneg %p1136
      $region122: #{tpu_custom_call.1} parent=5 // pred_check_branch
        %1139 = sbr.rel (%p1137) target = $region124
      $region123: #{tpu_custom_call.1} parent=5 // pred_region
        %s1140 = ssub.s32 %s19, 2
      $region124: #{tpu_custom_call.1} parent=5 // pred_fallthru
        _
    $region6: #{tpu_custom_call.1} parent=1 // loop_footer
      %s23 = sadd.s32 1, %s19
    $region7: #{tpu_custom_call.1} parent=1 // loop_footer_branch
      %18 = sbr.rel target = $region3
    $region8: #{tpu_custom_call.1} parent=1 // loop_exit
      _
    %1141 = vsyncpa [#allocation8], 1
    %s1142 = scalar_lea.sflag [#allocation8], 1
    %1143 = vsyncpa %s1142, 1
    %1144 = vsyncpa [#allocation9], 1
    %s1145 = scalar_lea.sflag [#allocation9], 1
    %1146 = vsyncpa %s1145, 1
    %1147 = vsyncpa [#allocation10], 1
    %s1148 = scalar_lea.sflag [#allocation10], 1
    %1149 = vsyncpa %s1148, 1

</llo_original>
